<compile_context>
chip_gen: v7x
topology: tpu7x:2x2x1
jax: 0.10.0
libtpu: 0.0.40
codegen_flags: <defaults>
</compile_context>

<pallas_src>
import math
from functools import partial

import jax
import jax.numpy as jnp
from jax.experimental import pallas as pl
from jax.experimental.pallas import tpu as pltpu

EPS = 1e-5
NEG_SLOPE = 0.1
LANES = 128

_PHYS_VMEM = None


def _physical_vmem_bytes():
    global _PHYS_VMEM
    if _PHYS_VMEM is None:
        try:
            _PHYS_VMEM = int(pltpu.get_tpu_info().vmem_capacity_bytes)
        except Exception:
            _PHYS_VMEM = 64 * 1024 * 1024   # conservative: v7x per-core VMEM
    return _PHYS_VMEM


def _round_up(x, m):
    return (x + m - 1) // m * m


def _nbytes(shape, dtype):
    return math.prod(shape) * jnp.dtype(dtype).itemsize


def _vmem_limit(double_bufs, single_bufs, scratch_bytes=0):
    """Streaming blocks double-buffered, resident blocks single-buffered."""
    need = sum(2 * _nbytes(*b) for b in double_bufs)
    need += sum(_nbytes(*b) for b in single_bufs)
    need += scratch_bytes
    need = int(need * 1.25) + (2 << 20)        # modest headroom only
    cap = min(_physical_vmem_bytes(), 100 * 1024 * 1024)
    return max(16 << 20, min(need, cap))


def _pick_th(h_out, w_out, target_rows, n_batch):
    """Largest row-tile height th that divides h_out, keeps th*w_out lane
    dense (multiple of 128, or the whole image), respects the row budget and
    leaves >=2 grid steps when batch == 1."""
    cands = [d for d in range(1, h_out + 1)
             if h_out % d == 0 and ((d * w_out) % LANES == 0 or d == h_out)]
    good = [d for d in cands if d * w_out <= target_rows]
    if n_batch < 2:
        split = [d for d in good if d < h_out]
        if split:
            return max(split)
    if good:
        return max(good)
    return min(cands)


@partial(jax.jit, static_argnames=("kernel_size", "padding", "tile_rows"))
def cnn_block(x, weight, gamma, beta, *, kernel_size=3, padding=1, tile_rows=1024):
    """x: [N, C_in, H, W] NCHW f32; weight: [C_out, C_in, k, k]. Returns NCHW f32.

    stride=1 only.
    # TODO(synk): support stride > 1 (some YOLO v1 blocks use stride 2).
    """
    n, c_in, h, w = x.shape
    c_out = weight.shape[0]
    k = kernel_size
    h_out = h + 2 * padding - k + 1
    w_out = w + 2 * padding - k + 1
    assert h_out >= 1 and w_out >= 1
    c_pad = _round_up(c_out, LANES)            # lane-dense channels for compute
    hp, wp = h + 2 * padding, w + 2 * padding

    th = _pick_th(h_out, w_out, tile_rows, n)  # rows of output per grid step
    n_h = h_out // th
    tile_m = th * w_out
    g = n * n_h
    m_total = n * h_out * w_out
    hwin = th + k - 1                          # input rows needed per tile

    # --- small XLA prologue: NHWC + spatial zero-pad, bf16. No im2col. ------
    x_nhwc = jnp.transpose(x, (0, 2, 3, 1))
    xp = jnp.pad(x_nhwc, ((0, 0), (padding, padding), (padding, padding), (0, 0)))
    xp = xp.astype(jnp.bfloat16)

    # weight -> [k*k, C_in, C_pad] bf16, tap order t = ki*k + kj.
    w_taps = jnp.transpose(weight, (2, 3, 1, 0)).reshape(k * k, c_in, c_out)
    w_taps = jnp.pad(w_taps, ((0, 0), (0, 0), (0, c_pad - c_out))).astype(jnp.bfloat16)

    # ------------- pass 1: conv via k*k tap accumulation + BN partials ------
    def conv_stats_kernel(x_ref, w_ref, y_ref, stats_ref):
        # x_ref:     [Hp, Wp, C_in]     padded NHWC image of this batch element
        # w_ref:     [k*k, C_in, C_pad] conv taps (resident, DMA'd once)
        # y_ref:     [tile_m, C_pad]    bf16 conv output tile
        # stats_ref: [2, C_pad]         f32: row 0 = sum, row 1 = sum of squares
        i = pl.program_id(1)
        h0 = i * th
        xwin = x_ref[pl.ds(h0, hwin), :, :]                    # [hwin, Wp, C_in]
        acc = jnp.zeros((tile_m, c_pad), jnp.float32)
        for t in range(k * k):
            ki, kj = divmod(t, k)
            tap = xwin[ki:ki + th, kj:kj + w_out, :].reshape(tile_m, c_in)
            acc = acc + jnp.dot(tap, w_ref[t], preferred_element_type=jnp.float32)
        stats_ref[0:1, :] = jnp.sum(acc, axis=0, keepdims=True)
        stats_ref[1:2, :] = jnp.sum(acc * acc, axis=0, keepdims=True)
        y_ref[...] = acc.astype(jnp.bfloat16)

    p1_cost = pl.CostEstimate(
        flops=2 * m_total * c_pad * (k * k * c_in) + 4 * m_total * c_pad,
        transcendentals=0,
        bytes_accessed=(xp.size * 2 + w_taps.size * 2
                        + g * tile_m * c_pad * 2 + g * 2 * c_pad * 4),
    )
    y2d, stats = pl.pallas_call(
        conv_stats_kernel,
        grid=(n, n_h),
        in_specs=[
            pl.BlockSpec((None, hp, wp, c_in), lambda b, i: (b, 0, 0, 0)),
            pl.BlockSpec((k * k, c_in, c_pad), lambda b, i: (0, 0, 0)),  # resident
        ],
        out_specs=[
            pl.BlockSpec((None, tile_m, c_pad), lambda b, i: (b * n_h + i, 0, 0)),
            pl.BlockSpec((None, 2, c_pad), lambda b, i: (b * n_h + i, 0, 0)),
        ],
        out_shape=[
            jax.ShapeDtypeStruct((g, tile_m, c_pad), jnp.bfloat16),
            jax.ShapeDtypeStruct((g, 2, c_pad), jnp.float32),
        ],
        compiler_params=pltpu.CompilerParams(
            dimension_semantics=("parallel", "parallel"),
            vmem_limit_bytes=_vmem_limit(
                double_bufs=[((hp, wp, c_in), jnp.bfloat16),
                             ((tile_m, c_pad), jnp.bfloat16),
                             ((2, c_pad), jnp.float32)],
                single_bufs=[((k * k, c_in, c_pad), jnp.bfloat16)],
                scratch_bytes=3 * tile_m * c_pad * 4 + 4 * hwin * wp * c_in * 2,
            ),
        ),
        cost_estimate=p1_cost,
    )(xp, w_taps)

    # --- BN finalize on tiny [C_pad] vectors: global stats, fused affine ----
    total = jnp.sum(stats[:, 0, :], axis=0)
    total_sq = jnp.sum(stats[:, 1, :], axis=0)
    mean = total / m_total
    var = total_sq / m_total - mean * mean           # biased var (training BN)
    inv_std = jax.lax.rsqrt(var + EPS)
    gamma_p = jnp.pad(gamma.astype(jnp.float32), (0, c_pad - c_out))
    beta_p = jnp.pad(beta.astype(jnp.float32), (0, c_pad - c_out))
    scale = (gamma_p * inv_std).reshape(1, c_pad)
    shift = (beta_p - mean * gamma_p * inv_std).reshape(1, c_pad)

    # ------------- pass 2: BN affine + LeakyReLU + channels-first layout ----
    # TODO(synk): input_output_aliases would make this in-place, but the bf16
    # intermediate vs. f32 module output dtypes differ, so it is skipped.
    def bn_act_kernel(y_ref, scale_ref, shift_ref, o_ref):
        # y_ref: [tile_m, C_pad] bf16; scale/shift: [1, C_pad] f32
        # o_ref: [C_out, tile_m] f32 (channels-first -> NCHW is a free reshape)
        v = y_ref[...].astype(jnp.float32) * scale_ref[...] + shift_ref[...]
        v = jnp.where(v >= 0, v, NEG_SLOPE * v)
        o_ref[...] = jnp.transpose(v)[:c_out, :]

    p2_cost = pl.CostEstimate(
        flops=4 * m_total * c_pad,
        transcendentals=0,
        bytes_accessed=g * tile_m * c_pad * 2 + m_total * c_out * 4 + 2 * c_pad * 4,
    )
    out3d = pl.pallas_call(
        bn_act_kernel,
        grid=(n, n_h),
        in_specs=[
            pl.BlockSpec((None, tile_m, c_pad), lambda b, i: (b * n_h + i, 0, 0)),
            pl.BlockSpec((1, c_pad), lambda b, i: (0, 0)),   # resident
            pl.BlockSpec((1, c_pad), lambda b, i: (0, 0)),   # resident
        ],
        out_specs=pl.BlockSpec((None, c_out, tile_m), lambda b, i: (b, 0, i)),
        out_shape=jax.ShapeDtypeStruct((n, c_out, h_out * w_out), jnp.float32),
        compiler_params=pltpu.CompilerParams(
            dimension_semantics=("parallel", "parallel"),
            vmem_limit_bytes=_vmem_limit(
                double_bufs=[((tile_m, c_pad), jnp.bfloat16),
                             ((c_out, tile_m), jnp.float32)],
                single_bufs=[((1, c_pad), jnp.float32),
                             ((1, c_pad), jnp.float32)],
                scratch_bytes=3 * tile_m * c_pad * 4,
            ),
        ),
        cost_estimate=p2_cost,
    )(y2d, scale, shift)

    # Free reshape: no trailing XLA transpose, no padded channels in HBM.
    return out3d.reshape(n, c_out, h_out, w_out)


# ---------------------------------------------------------------------------
# Pure-JAX f32 reference (conv + train-mode batchnorm + leaky relu)
# ---------------------------------------------------------------------------
def reference(x, weight, gamma, beta, *, padding=1):
    y = jax.lax.conv_general_dilated(
        x, weight, window_strides=(1, 1),
        padding=[(padding, padding), (padding, padding)],
        dimension_numbers=("NCHW", "OIHW", "NCHW"))
    mean = jnp.mean(y, axis=(0, 2, 3), keepdims=True)
    var = jnp.mean((y - mean) ** 2, axis=(0, 2, 3), keepdims=True)
    y = (y - mean) / jnp.sqrt(var + EPS)
    y = y * gamma.reshape(1, -1, 1, 1) + beta.reshape(1, -1, 1, 1)
    return jnp.where(y >= 0, y, NEG_SLOPE * y)


if __name__ == "__main__":
    # CNNBlock(4, 8, kernel_size=3, padding=1) at small shapes.
    N, C_IN, C_OUT, H, W = 2, 4, 8, 16, 16
    key = jax.random.PRNGKey(0)
    kx, kw_ = jax.random.split(key)

    x = jax.random.normal(kx, (N, C_IN, H, W), dtype=jnp.float32)
    weight = jax.random.normal(kw_, (C_OUT, C_IN, 3, 3), dtype=jnp.float32) * 0.1
    gamma = jnp.ones((C_OUT,), jnp.float32)   # BatchNorm2d default init
    beta = jnp.zeros((C_OUT,), jnp.float32)

    # tile_rows=128 -> th=8 row tiles -> grid (2 batches x 2 tiles) = 4 steps,
    # which exercises the HBM<->VMEM pipeline even at this small size.
    out = jax.block_until_ready(
        cnn_block(x, weight, gamma, beta, kernel_size=3, padding=1, tile_rows=128))
    ref = jax.block_until_ready(reference(x, weight, gamma, beta, padding=1))

    assert out.shape == (N, C_OUT, H, W), out.shape
    # Loose tolerance vs the f32 reference: bf16 MXU operands + bf16 conv
    # intermediate (f32 accumulation and f32 BN stats) per the perf review.
    max_err = float(jnp.max(jnp.abs(out - ref)))
    assert jnp.allclose(out, ref, atol=5e-2, rtol=5e-2), max_err
    print("KERNEL_OK")
</pallas_src>

<mosaic_0001>
module attributes {stable_mosaic.version = 11 : i64} {
  func.func @bn_act_kernel(%arg0: i32, %arg1: i32, %arg2: memref<1x128x128xbf16, #tpu.memory_space<vmem>>, %arg3: memref<1x128xf32, #tpu.memory_space<vmem>>, %arg4: memref<1x128xf32, #tpu.memory_space<vmem>>, %arg5: memref<1x8x128xf32, #tpu.memory_space<vmem>>) attributes {dimension_semantics = [#tpu.dimension_semantics<parallel>, #tpu.dimension_semantics<parallel>], iteration_bounds = array<i64: 2, 2>, scalar_prefetch = 0 : i64, scratch_operands = 0 : i64, tpu.core_type = #tpu.core_type<tc>, window_params = [{transform_indices = @transform_0, window_bounds = array<i64: 1, 128, 128>}, {pipeline_mode = #tpu.pipeline_mode<synchronous>, transform_indices = @transform_1, window_bounds = array<i64: 1, 128>}, {pipeline_mode = #tpu.pipeline_mode<synchronous>, transform_indices = @transform_2, window_bounds = array<i64: 1, 128>}, {transform_indices = @transform_3, window_bounds = array<i64: 1, 8, 128>}]} {
    %c0 = arith.constant 0 : index
    %c0_0 = arith.constant 0 : index
    %c0_1 = arith.constant 0 : index
    %0 = vector.load %arg2[%c0, %c0_0, %c0_1] : memref<1x128x128xbf16, #tpu.memory_space<vmem>>, vector<1x128x128xbf16>
    %1 = vector.shape_cast %0 : vector<1x128x128xbf16> to vector<128x128xbf16>
    %2 = arith.extf %1 : vector<128x128xbf16> to vector<128x128xf32>
    %c0_2 = arith.constant 0 : index
    %c0_3 = arith.constant 0 : index
    %3 = vector.load %arg3[%c0_2, %c0_3] : memref<1x128xf32, #tpu.memory_space<vmem>>, vector<1x128xf32>
    %4 = vector.broadcast %3 : vector<1x128xf32> to vector<128x128xf32>
    %5 = arith.mulf %2, %4 : vector<128x128xf32>
    %c0_4 = arith.constant 0 : index
    %c0_5 = arith.constant 0 : index
    %6 = vector.load %arg4[%c0_4, %c0_5] : memref<1x128xf32, #tpu.memory_space<vmem>>, vector<1x128xf32>
    %7 = vector.broadcast %6 : vector<1x128xf32> to vector<128x128xf32>
    %8 = arith.addf %5, %7 : vector<128x128xf32>
    %cst = arith.constant 0.000000e+00 : f32
    %9 = vector.broadcast %cst : f32 to vector<128x128xf32>
    %10 = arith.cmpf oge, %8, %9 : vector<128x128xf32>
    %cst_6 = arith.constant 1.000000e-01 : f32
    %11 = vector.broadcast %cst_6 : f32 to vector<128x128xf32>
    %12 = arith.mulf %11, %8 : vector<128x128xf32>
    %13 = arith.select %10, %8, %12 : vector<128x128xi1>, vector<128x128xf32>
    %14 = tpu.transpose %13, [1, 0] : vector<128x128xf32> -> vector<128x128xf32>
    %15 = vector.extract_strided_slice %14 {offsets = [0, 0], sizes = [8, 128], strides = [1, 1]} : vector<128x128xf32> to vector<8x128xf32>
    %c0_7 = arith.constant 0 : index
    %c0_8 = arith.constant 0 : index
    %c0_9 = arith.constant 0 : index
    %16 = vector.load %arg5[%c0_7, %c0_8, %c0_9] : memref<1x8x128xf32, #tpu.memory_space<vmem>>, vector<1x8x128xf32>
    %17 = vector.shape_cast %16 : vector<1x8x128xf32> to vector<8x128xf32>
    %18 = vector.shape_cast %15 : vector<8x128xf32> to vector<1x8x128xf32>
    tpu.vector_store %arg5[%c0_7, %c0_8, %c0_9], %18 {strides = array<i32>} : memref<1x8x128xf32, #tpu.memory_space<vmem>>, vector<1x8x128xf32>,
    return
  }
  func.func @transform_0(%arg0: i32, %arg1: i32) -> (i32, i32, i32) {
    %c2_i32 = arith.constant 2 : i32
    %0 = arith.muli %arg0, %c2_i32 : i32
    %1 = arith.addi %0, %arg1 : i32
    %c0_i32 = arith.constant 0 : i32
    %c0_i32_0 = arith.constant 0 : i32
    %c0_i32_1 = arith.constant 0 : i32
    return %1, %c0_i32, %c0_i32_0 : i32, i32, i32
  }
  func.func @transform_1(%arg0: i32, %arg1: i32) -> (i32, i32) {
    %c0_i32 = arith.constant 0 : i32
    %c0_i32_0 = arith.constant 0 : i32
    %c0_i32_1 = arith.constant 0 : i32
    return %c0_i32, %c0_i32_0 : i32, i32
  }
  func.func @transform_2(%arg0: i32, %arg1: i32) -> (i32, i32) {
    %c0_i32 = arith.constant 0 : i32
    %c0_i32_0 = arith.constant 0 : i32
    %c0_i32_1 = arith.constant 0 : i32
    return %c0_i32, %c0_i32_0 : i32, i32
  }
  func.func @transform_3(%arg0: i32, %arg1: i32) -> (i32, i32, i32) {
    %c0_i32 = arith.constant 0 : i32
    %c0_i32_0 = arith.constant 0 : i32
    return %arg0, %c0_i32, %arg1 : i32, i32, i32
  }
}

module attributes {stable_mosaic.version = 11 : i64} {
  func.func @conv_stats_kernel(%arg0: i32, %arg1: i32, %arg2: memref<1x18x18x4xbf16, #tpu.memory_space<vmem>>, %arg3: memref<9x4x128xbf16, #tpu.memory_space<vmem>>, %arg4: memref<1x128x128xbf16, #tpu.memory_space<vmem>>, %arg5: memref<1x2x128xf32, #tpu.memory_space<vmem>>) attributes {dimension_semantics = [#tpu.dimension_semantics<parallel>, #tpu.dimension_semantics<parallel>], iteration_bounds = array<i64: 2, 2>, scalar_prefetch = 0 : i64, scratch_operands = 0 : i64, tpu.core_type = #tpu.core_type<tc>, window_params = [{transform_indices = @transform_0, window_bounds = array<i64: 1, 18, 18, 4>}, {pipeline_mode = #tpu.pipeline_mode<synchronous>, transform_indices = @transform_1, window_bounds = array<i64: 9, 4, 128>}, {transform_indices = @transform_2, window_bounds = array<i64: 1, 128, 128>}, {transform_indices = @transform_3, window_bounds = array<i64: 1, 2, 128>}]} {
    %c8_i32 = arith.constant 8 : i32
    %0 = arith.muli %arg1, %c8_i32 : i32
    %c0 = arith.constant 0 : index
    %1 = arith.index_cast %0 : i32 to index
    %c0_0 = arith.constant 0 : index
    %c0_1 = arith.constant 0 : index
    %2 = vector.load %arg2[%c0, %1, %c0_0, %c0_1] : memref<1x18x18x4xbf16, #tpu.memory_space<vmem>>, vector<1x10x18x4xbf16>
    %3 = vector.shape_cast %2 : vector<1x10x18x4xbf16> to vector<10x18x4xbf16>
    %cst = arith.constant 0.000000e+00 : f32
    %4 = vector.broadcast %cst : f32 to vector<128x128xf32>
    %5 = vector.extract_strided_slice %3 {offsets = [0, 0, 0], sizes = [8, 16, 4], strides = [1, 1, 1]} : vector<10x18x4xbf16> to vector<8x16x4xbf16>
    %6 = vector.shape_cast %5 : vector<8x16x4xbf16> to vector<128x4xbf16>
    %c0_2 = arith.constant 0 : index
    %c0_3 = arith.constant 0 : index
    %c0_4 = arith.constant 0 : index
    %7 = vector.load %arg3[%c0_2, %c0_3, %c0_4] : memref<9x4x128xbf16, #tpu.memory_space<vmem>>, vector<1x4x128xbf16>
    %8 = vector.shape_cast %7 : vector<1x4x128xbf16> to vector<4x128xbf16>
    %cst_5 = arith.constant dense<0.000000e+00> : vector<128x128xf32>
    %9 = tpu.matmul %6, %8, %cst_5 {dimension_numbers = #tpu.dot_dimension_numbers<[1], [0], [0], [1], [0, 0, 1, 1], [], []>} : vector<128x4xbf16>, vector<4x128xbf16>, vector<128x128xf32> -> vector<128x128xf32>
    %10 = arith.addf %4, %9 : vector<128x128xf32>
    %11 = vector.extract_strided_slice %3 {offsets = [0, 1, 0], sizes = [8, 16, 4], strides = [1, 1, 1]} : vector<10x18x4xbf16> to vector<8x16x4xbf16>
    %12 = vector.shape_cast %11 : vector<8x16x4xbf16> to vector<128x4xbf16>
    %c1 = arith.constant 1 : index
    %c0_6 = arith.constant 0 : index
    %c0_7 = arith.constant 0 : index
    %13 = vector.load %arg3[%c1, %c0_6, %c0_7] : memref<9x4x128xbf16, #tpu.memory_space<vmem>>, vector<1x4x128xbf16>
    %14 = vector.shape_cast %13 : vector<1x4x128xbf16> to vector<4x128xbf16>
    %cst_8 = arith.constant dense<0.000000e+00> : vector<128x128xf32>
    %15 = tpu.matmul %12, %14, %cst_8 {dimension_numbers = #tpu.dot_dimension_numbers<[1], [0], [0], [1], [0, 0, 1, 1], [], []>} : vector<128x4xbf16>, vector<4x128xbf16>, vector<128x128xf32> -> vector<128x128xf32>
    %16 = arith.addf %10, %15 : vector<128x128xf32>
    %17 = vector.extract_strided_slice %3 {offsets = [0, 2, 0], sizes = [8, 16, 4], strides = [1, 1, 1]} : vector<10x18x4xbf16> to vector<8x16x4xbf16>
    %18 = vector.shape_cast %17 : vector<8x16x4xbf16> to vector<128x4xbf16>
    %c2 = arith.constant 2 : index
    %c0_9 = arith.constant 0 : index
    %c0_10 = arith.constant 0 : index
    %19 = vector.load %arg3[%c2, %c0_9, %c0_10] : memref<9x4x128xbf16, #tpu.memory_space<vmem>>, vector<1x4x128xbf16>
    %20 = vector.shape_cast %19 : vector<1x4x128xbf16> to vector<4x128xbf16>
    %cst_11 = arith.constant dense<0.000000e+00> : vector<128x128xf32>
    %21 = tpu.matmul %18, %20, %cst_11 {dimension_numbers = #tpu.dot_dimension_numbers<[1], [0], [0], [1], [0, 0, 1, 1], [], []>} : vector<128x4xbf16>, vector<4x128xbf16>, vector<128x128xf32> -> vector<128x128xf32>
    %22 = arith.addf %16, %21 : vector<128x128xf32>
    %23 = vector.extract_strided_slice %3 {offsets = [1, 0, 0], sizes = [8, 16, 4], strides = [1, 1, 1]} : vector<10x18x4xbf16> to vector<8x16x4xbf16>
    %24 = vector.shape_cast %23 : vector<8x16x4xbf16> to vector<128x4xbf16>
    %c3 = arith.constant 3 : index
    %c0_12 = arith.constant 0 : index
    %c0_13 = arith.constant 0 : index
    %25 = vector.load %arg3[%c3, %c0_12, %c0_13] : memref<9x4x128xbf16, #tpu.memory_space<vmem>>, vector<1x4x128xbf16>
    %26 = vector.shape_cast %25 : vector<1x4x128xbf16> to vector<4x128xbf16>
    %cst_14 = arith.constant dense<0.000000e+00> : vector<128x128xf32>
    %27 = tpu.matmul %24, %26, %cst_14 {dimension_numbers = #tpu.dot_dimension_numbers<[1], [0], [0], [1], [0, 0, 1, 1], [], []>} : vector<128x4xbf16>, vector<4x128xbf16>, vector<128x128xf32> -> vector<128x128xf32>
    %28 = arith.addf %22, %27 : vector<128x128xf32>
    %29 = vector.extract_strided_slice %3 {offsets = [1, 1, 0], sizes = [8, 16, 4], strides = [1, 1, 1]} : vector<10x18x4xbf16> to vector<8x16x4xbf16>
    %30 = vector.shape_cast %29 : vector<8x16x4xbf16> to vector<128x4xbf16>
    %c4 = arith.constant 4 : index
    %c0_15 = arith.constant 0 : index
    %c0_16 = arith.constant 0 : index
    %31 = vector.load %arg3[%c4, %c0_15, %c0_16] : memref<9x4x128xbf16, #tpu.memory_space<vmem>>, vector<1x4x128xbf16>
    %32 = vector.shape_cast %31 : vector<1x4x128xbf16> to vector<4x128xbf16>
    %cst_17 = arith.constant dense<0.000000e+00> : vector<128x128xf32>
    %33 = tpu.matmul %30, %32, %cst_17 {dimension_numbers = #tpu.dot_dimension_numbers<[1], [0], [0], [1], [0, 0, 1, 1], [], []>} : vector<128x4xbf16>, vector<4x128xbf16>, vector<128x128xf32> -> vector<128x128xf32>
    %34 = arith.addf %28, %33 : vector<128x128xf32>
    %35 = vector.extract_strided_slice %3 {offsets = [1, 2, 0], sizes = [8, 16, 4], strides = [1, 1, 1]} : vector<10x18x4xbf16> to vector<8x16x4xbf16>
    %36 = vector.shape_cast %35 : vector<8x16x4xbf16> to vector<128x4xbf16>
    %c5 = arith.constant 5 : index
    %c0_18 = arith.constant 0 : index
    %c0_19 = arith.constant 0 : index
    %37 = vector.load %arg3[%c5, %c0_18, %c0_19] : memref<9x4x128xbf16, #tpu.memory_space<vmem>>, vector<1x4x128xbf16>
    %38 = vector.shape_cast %37 : vector<1x4x128xbf16> to vector<4x128xbf16>
    %cst_20 = arith.constant dense<0.000000e+00> : vector<128x128xf32>
    %39 = tpu.matmul %36, %38, %cst_20 {dimension_numbers = #tpu.dot_dimension_numbers<[1], [0], [0], [1], [0, 0, 1, 1], [], []>} : vector<128x4xbf16>, vector<4x128xbf16>, vector<128x128xf32> -> vector<128x128xf32>
    %40 = arith.addf %34, %39 : vector<128x128xf32>
    %41 = vector.extract_strided_slice %3 {offsets = [2, 0, 0], sizes = [8, 16, 4], strides = [1, 1, 1]} : vector<10x18x4xbf16> to vector<8x16x4xbf16>
    %42 = vector.shape_cast %41 : vector<8x16x4xbf16> to vector<128x4xbf16>
    %c6 = arith.constant 6 : index
    %c0_21 = arith.constant 0 : index
    %c0_22 = arith.constant 0 : index
    %43 = vector.load %arg3[%c6, %c0_21, %c0_22] : memref<9x4x128xbf16, #tpu.memory_space<vmem>>, vector<1x4x128xbf16>
    %44 = vector.shape_cast %43 : vector<1x4x128xbf16> to vector<4x128xbf16>
    %cst_23 = arith.constant dense<0.000000e+00> : vector<128x128xf32>
    %45 = tpu.matmul %42, %44, %cst_23 {dimension_numbers = #tpu.dot_dimension_numbers<[1], [0], [0], [1], [0, 0, 1, 1], [], []>} : vector<128x4xbf16>, vector<4x128xbf16>, vector<128x128xf32> -> vector<128x128xf32>
    %46 = arith.addf %40, %45 : vector<128x128xf32>
    %47 = vector.extract_strided_slice %3 {offsets = [2, 1, 0], sizes = [8, 16, 4], strides = [1, 1, 1]} : vector<10x18x4xbf16> to vector<8x16x4xbf16>
    %48 = vector.shape_cast %47 : vector<8x16x4xbf16> to vector<128x4xbf16>
    %c7 = arith.constant 7 : index
    %c0_24 = arith.constant 0 : index
    %c0_25 = arith.constant 0 : index
    %49 = vector.load %arg3[%c7, %c0_24, %c0_25] : memref<9x4x128xbf16, #tpu.memory_space<vmem>>, vector<1x4x128xbf16>
    %50 = vector.shape_cast %49 : vector<1x4x128xbf16> to vector<4x128xbf16>
    %cst_26 = arith.constant dense<0.000000e+00> : vector<128x128xf32>
    %51 = tpu.matmul %48, %50, %cst_26 {dimension_numbers = #tpu.dot_dimension_numbers<[1], [0], [0], [1], [0, 0, 1, 1], [], []>} : vector<128x4xbf16>, vector<4x128xbf16>, vector<128x128xf32> -> vector<128x128xf32>
    %52 = arith.addf %46, %51 : vector<128x128xf32>
    %53 = vector.extract_strided_slice %3 {offsets = [2, 2, 0], sizes = [8, 16, 4], strides = [1, 1, 1]} : vector<10x18x4xbf16> to vector<8x16x4xbf16>
    %54 = vector.shape_cast %53 : vector<8x16x4xbf16> to vector<128x4xbf16>
    %c8 = arith.constant 8 : index
    %c0_27 = arith.constant 0 : index
    %c0_28 = arith.constant 0 : index
    %55 = vector.load %arg3[%c8, %c0_27, %c0_28] : memref<9x4x128xbf16, #tpu.memory_space<vmem>>, vector<1x4x128xbf16>
    %56 = vector.shape_cast %55 : vector<1x4x128xbf16> to vector<4x128xbf16>
    %cst_29 = arith.constant dense<0.000000e+00> : vector<128x128xf32>
    %57 = tpu.matmul %54, %56, %cst_29 {dimension_numbers = #tpu.dot_dimension_numbers<[1], [0], [0], [1], [0, 0, 1, 1], [], []>} : vector<128x4xbf16>, vector<4x128xbf16>, vector<128x128xf32> -> vector<128x128xf32>
    %58 = arith.addf %52, %57 : vector<128x128xf32>
    %cst_30 = arith.constant dense<0.000000e+00> : vector<128xf32>
    %59 = vector.multi_reduction <add>, %58, %cst_30 [0] : vector<128x128xf32> to vector<128xf32>
    %60 = vector.shape_cast %59 : vector<128xf32> to vector<1x128xf32>
    %c0_31 = arith.constant 0 : index
    %c0_32 = arith.constant 0 : index
    %c0_33 = arith.constant 0 : index
    %61 = vector.load %arg5[%c0_31, %c0_32, %c0_33] : memref<1x2x128xf32, #tpu.memory_space<vmem>>, vector<1x1x128xf32>
    %62 = vector.shape_cast %61 : vector<1x1x128xf32> to vector<1x128xf32>
    %63 = vector.shape_cast %60 : vector<1x128xf32> to vector<1x1x128xf32>
    tpu.vector_store %arg5[%c0_31, %c0_32, %c0_33], %63 {strides = array<i32>} : memref<1x2x128xf32, #tpu.memory_space<vmem>>, vector<1x1x128xf32>,
    %64 = arith.mulf %58, %58 : vector<128x128xf32>
    %cst_34 = arith.constant dense<0.000000e+00> : vector<128xf32>
    %65 = vector.multi_reduction <add>, %64, %cst_34 [0] : vector<128x128xf32> to vector<128xf32>
    %66 = vector.shape_cast %65 : vector<128xf32> to vector<1x128xf32>
    %c0_35 = arith.constant 0 : index
    %c1_36 = arith.constant 1 : index
    %c0_37 = arith.constant 0 : index
    %67 = vector.load %arg5[%c0_35, %c1_36, %c0_37] : memref<1x2x128xf32, #tpu.memory_space<vmem>>, vector<1x1x128xf32>
    %68 = vector.shape_cast %67 : vector<1x1x128xf32> to vector<1x128xf32>
    %69 = vector.shape_cast %66 : vector<1x128xf32> to vector<1x1x128xf32>
    tpu.vector_store %arg5[%c0_35, %c1_36, %c0_37], %69 {strides = array<i32>} : memref<1x2x128xf32, #tpu.memory_space<vmem>>, vector<1x1x128xf32>,
    %70 = arith.truncf %58 : vector<128x128xf32> to vector<128x128xbf16>
    %c0_38 = arith.constant 0 : index
    %c0_39 = arith.constant 0 : index
    %c0_40 = arith.constant 0 : index
    %71 = vector.load %arg4[%c0_38, %c0_39, %c0_40] : memref<1x128x128xbf16, #tpu.memory_space<vmem>>, vector<1x128x128xbf16>
    %72 = vector.shape_cast %71 : vector<1x128x128xbf16> to vector<128x128xbf16>
    %73 = vector.shape_cast %70 : vector<128x128xbf16> to vector<1x128x128xbf16>
    tpu.vector_store %arg4[%c0_38, %c0_39, %c0_40], %73 {strides = array<i32>} : memref<1x128x128xbf16, #tpu.memory_space<vmem>>, vector<1x128x128xbf16>,
    return
  }
  func.func @transform_0(%arg0: i32, %arg1: i32) -> (i32, i32, i32, i32) {
    %c0_i32 = arith.constant 0 : i32
    %c0_i32_0 = arith.constant 0 : i32
    %c0_i32_1 = arith.constant 0 : i32
    %c0_i32_2 = arith.constant 0 : i32
    return %arg0, %c0_i32, %c0_i32_0, %c0_i32_1 : i32, i32, i32, i32
  }
  func.func @transform_1(%arg0: i32, %arg1: i32) -> (i32, i32, i32) {
    %c0_i32 = arith.constant 0 : i32
    %c0_i32_0 = arith.constant 0 : i32
    %c0_i32_1 = arith.constant 0 : i32
    %c0_i32_2 = arith.constant 0 : i32
    return %c0_i32, %c0_i32_0, %c0_i32_1 : i32, i32, i32
  }
  func.func @transform_2(%arg0: i32, %arg1: i32) -> (i32, i32, i32) {
    %c2_i32 = arith.constant 2 : i32
    %0 = arith.muli %arg0, %c2_i32 : i32
    %1 = arith.addi %0, %arg1 : i32
    %c0_i32 = arith.constant 0 : i32
    %c0_i32_0 = arith.constant 0 : i32
    %c0_i32_1 = arith.constant 0 : i32
    return %1, %c0_i32, %c0_i32_0 : i32, i32, i32
  }
  func.func @transform_3(%arg0: i32, %arg1: i32) -> (i32, i32, i32) {
    %c2_i32 = arith.constant 2 : i32
    %0 = arith.muli %arg0, %c2_i32 : i32
    %1 = arith.addi %0, %arg1 : i32
    %c0_i32 = arith.constant 0 : i32
    %c0_i32_0 = arith.constant 0 : i32
    %c0_i32_1 = arith.constant 0 : i32
    return %1, %c0_i32, %c0_i32_0 : i32, i32, i32
  }
}

</mosaic_0001>

<llo_original>
// kernel: cnn_block.3
$region0: #{cnn_block.3}
  #allocation0 [shape = 'u32[]', space=smem, size = 0x4, offset = 0x4, fixed_abs, tag = 'smem constant byte address 0x4 - core index']
  #allocation1 [shape = 'u32[144,128]{1,0:T(1,128)}', space=vmem, size = 0x12000, scoped, tag = 'internal scratch']
  %s0 = inlined_call_operand.vmem [shape: bf16[4,128,128], index: 0, kind: input, shape index: {}]
  %s1 = inlined_call_operand.vmem [shape: f32[1,128], index: 1, kind: input, shape index: {}]
  %s2 = inlined_call_operand.vmem [shape: f32[1,128], index: 2, kind: input, shape index: {}]
  %s3 = inlined_call_operand.vmem [shape: f32[2,8,256], index: 3, kind: output, shape index: {}]
  %s4 = sld [smem:[#allocation0]]
  $region45: #{cnn_block.3} parent=0
    _
  %s6 = ssub.s32 1, %s4
  %s7 = scalar_select 0, %s6, %s4
  loop: start=0, step=1, limit=6
  $region2: #{cnn_block.3} parent=0 // loop_pre_header
    _
  $region3: #{cnn_block.3} parent=0 // loop_header
    %s9 = sphi 0, %s13
    %p10 = scmp.ge.s32.totalorder %s9, 6
    %s16 = sphi 0, %s28
    %s17 = sphi 0, %s24
    %s18 = sphi 0, %s16
    %s19 = sphi 0, %s17
    %s20 = sphi 0, %s18
    %s21 = sphi 0, %s19
    %s35 = sphi 0, %s37
    %s38 = sphi 0, %s35
    %s39 = sphi 0, %s38
    %s55 = sphi 0, %s39
    %s59 = sphi 0, %s59
    %s61 = sphi 0, %s59
    %s62 = sphi 0, %s61
    %s76 = sphi 0, %s62
    %s80 = sphi 0, %s80
    %s82 = sphi 0, %s80
    %s83 = sphi 0, %s82
    %s97 = sphi 0, %s83
    %s105 = sphi 0, %s107
    %s108 = sphi 0, %s105
    %s109 = sphi 0, %s108
    %s125 = sphi 0, %s109
  $region4: #{cnn_block.3} parent=0 // loop_header_branch
    %12 = sbr.rel (%p10) target = $region8
  $region5: #{cnn_block.3} parent=0 // loop_body
    %s14 = ssub.s32 %s9, 1
    %s15 = ssub.s32 %s9, 2
    %s22 = sadd.s32 1, %s17
    %p23 = scmp.ge.s32.totalorder %s22, 2
    %s24 = scalar_select %p23, 0, %s22
    %s25 = sadd.s32 1, %s16
    %s26 = scalar_select %p23, %s25, %s16
    %p27 = scmp.ge.s32.totalorder %s26, 2
    %s28 = scalar_select %p27, 0, %s26
    %s29 = smul.u32 %s16, 2
    %s30 = sadd.s32 %s29, %s17
    %s31 = smul.u32 %s28, 2
    %s32 = sadd.s32 %s31, %s24
    %s33 = ssub.s32 %s30, %s32
    %p34 = scmp.eq.s32.totalorder %s33, 0
    %s36 = sadd.s32 %s35, 1
    %s37 = scalar_select %p34, %s35, %s36
    %p40 = pneg %p34
    %p41 = scmp.eq.s32.totalorder %s9, 3
    %p42 = por %p40, %p41
    %p43 = scmp.ne.s32.totalorder %s35, %s38
    %p44 = scmp.eq.s32.totalorder %s9, 0
    %p45 = por %p43, %p44
    %p46 = scmp.ne.s32.totalorder %s35, %s38
    %p47 = scmp.eq.s32.totalorder %s14, 3
    %p48 = por %p46, %p47
    %p49 = scmp.ne.s32.totalorder %s38, %s39
    %p50 = scmp.eq.s32.totalorder %s14, 0
    %p51 = por %p49, %p50
    %p52 = scmp.ne.s32.totalorder %s38, %s39
    %p53 = scmp.eq.s32.totalorder %s15, 3
    %p54 = por %p52, %p53
    %p56 = scmp.ne.s32.totalorder %s39, %s55
    %p57 = scmp.eq.s32.totalorder %s15, 0
    %p58 = por %p56, %p57
    %s60 = sadd.s32 %s59, 1
    %p63 = scmp.eq.s32.totalorder %s9, 3
    %p64 = scmp.ne.s32.totalorder %s59, %s61
    %p65 = scmp.eq.s32.totalorder %s9, 0
    %p66 = por %p64, %p65
    %p67 = scmp.ne.s32.totalorder %s59, %s61
    %p68 = scmp.eq.s32.totalorder %s14, 3
    %p69 = por %p67, %p68
    %p70 = scmp.ne.s32.totalorder %s61, %s62
    %p71 = scmp.eq.s32.totalorder %s14, 0
    %p72 = por %p70, %p71
    %p73 = scmp.ne.s32.totalorder %s61, %s62
    %p74 = scmp.eq.s32.totalorder %s15, 3
    %p75 = por %p73, %p74
    %p77 = scmp.ne.s32.totalorder %s62, %s76
    %p78 = scmp.eq.s32.totalorder %s15, 0
    %p79 = por %p77, %p78
    %s81 = sadd.s32 %s80, 1
    %p84 = scmp.eq.s32.totalorder %s9, 3
    %p85 = scmp.ne.s32.totalorder %s80, %s82
    %p86 = scmp.eq.s32.totalorder %s9, 0
    %p87 = por %p85, %p86
    %p88 = scmp.ne.s32.totalorder %s80, %s82
    %p89 = scmp.eq.s32.totalorder %s14, 3
    %p90 = por %p88, %p89
    %p91 = scmp.ne.s32.totalorder %s82, %s83
    %p92 = scmp.eq.s32.totalorder %s14, 0
    %p93 = por %p91, %p92
    %p94 = scmp.ne.s32.totalorder %s82, %s83
    %p95 = scmp.eq.s32.totalorder %s15, 3
    %p96 = por %p94, %p95
    %p98 = scmp.ne.s32.totalorder %s83, %s97
    %p99 = scmp.eq.s32.totalorder %s15, 0
    %p100 = por %p98, %p99
    %s101 = ssub.s32 %s16, %s28
    %s102 = ssub.s32 %s17, %s24
    %s103 = sor.u32 %s101, %s102
    %p104 = scmp.eq.s32.totalorder %s103, 0
    %s106 = sadd.s32 %s105, 1
    %s107 = scalar_select %p104, %s105, %s106
    %p110 = pneg %p104
    %p111 = scmp.eq.s32.totalorder %s9, 3
    %p112 = por %p110, %p111
    %p113 = scmp.ne.s32.totalorder %s105, %s108
    %p114 = scmp.eq.s32.totalorder %s9, 0
    %p115 = por %p113, %p114
    %p116 = scmp.ne.s32.totalorder %s105, %s108
    %p117 = scmp.eq.s32.totalorder %s14, 3
    %p118 = por %p116, %p117
    %p119 = scmp.ne.s32.totalorder %s108, %s109
    %p120 = scmp.eq.s32.totalorder %s14, 0
    %p121 = por %p119, %p120
    %p122 = scmp.ne.s32.totalorder %s108, %s109
    %p123 = scmp.eq.s32.totalorder %s15, 3
    %p124 = por %p122, %p123
    %p126 = scmp.ne.s32.totalorder %s109, %s125
    %p127 = scmp.eq.s32.totalorder %s15, 0
    %p128 = por %p126, %p127
    %p129 = scmp.le.s32.totalorder 1, %s9
    %p130 = scmp.lt.s32.totalorder %s9, 5
    %p131 = pnand %p129, %p130
    %p132 = pneg %p131
    // Predicated region
    $region9: #{cnn_block.3} parent=5 // pred_check
      _
    $region10: #{cnn_block.3} parent=5 // pred_check_branch
      %134 = sbr.rel (%p131) target = $region12
    $region11: #{cnn_block.3} parent=5 // pred_region
      %s135 = ssub.s32 %s9, 1
      // Predicated region
      $region13: #{cnn_block.3} parent=11 // pred_check
        %p136 = pneg %p72
      $region14: #{cnn_block.3} parent=11 // pred_check_branch
        %138 = sbr.rel (%p136) target = $region16
      $region15: #{cnn_block.3} parent=11 // pred_region
        _
      $region16: #{cnn_block.3} parent=11 // pred_fallthru
        _
      // Predicated region
      $region17: #{cnn_block.3} parent=11 // pred_check
        %p139 = pneg %p93
      $region18: #{cnn_block.3} parent=11 // pred_check_branch
        %141 = sbr.rel (%p139) target = $region20
      $region19: #{cnn_block.3} parent=11 // pred_region
        _
      $region20: #{cnn_block.3} parent=11 // pred_fallthru
        _
    $region12: #{cnn_block.3} parent=5 // pred_fallthru
      _
    %p142 = scmp.lt.s32.totalorder %s9, 4
    // Predicated region
    $region21: #{cnn_block.3} parent=5 // pred_check
      %p143 = pneg %p142
    $region22: #{cnn_block.3} parent=5 // pred_check_branch
      %145 = sbr.rel (%p143) target = $region24
    $region23: #{cnn_block.3} parent=5 // pred_region
      // Predicated region
      $region25: #{cnn_block.3} parent=23 // pred_check
        %p146 = pneg %p45
      $region26: #{cnn_block.3} parent=23 // pred_check_branch
        %148 = sbr.rel (%p146) target = $region28
      $region27: #{cnn_block.3} parent=23 // pred_region
        %s149 = smul.u32 %s16, 2
        %s150 = sadd.s32 %s149, %s17
        %p151 = scmp.lt.s32.totalorder %s150, 3
        %s152 = scalar_select %p151, %s150, 3
        %s153 = smul.addr %s152, 16
        %s154 = smul.addr %s153, 4
        %s155 = scalar_lea.vmem %s0, %s154
        %s156 = smul.u32 %s16, 2
        %s157 = sadd.s32 %s156, %s17
      $region28: #{cnn_block.3} parent=23 // pred_fallthru
        _
    $region24: #{cnn_block.3} parent=5 // pred_fallthru
      _
    %p158 = scmp.le.s32.totalorder 1, %s9
    %p159 = scmp.lt.s32.totalorder %s9, 5
    %p160 = pnand %p158, %p159
    %p161 = pneg %p160
    // Predicated region
    $region29: #{cnn_block.3} parent=5 // pred_check
      _
    $region30: #{cnn_block.3} parent=5 // pred_check_branch
      %163 = sbr.rel (%p160) target = $region32
    $region31: #{cnn_block.3} parent=5 // pred_region
      %s164 = ssub.s32 %s9, 1
      %s165 = smul.u32 %s18, 2
      %s166 = sadd.s32 %s165, %s19
      %p167 = scmp.lt.s32.totalorder %s166, 3
      %s168 = scalar_select %p167, %s166, 3
      %s169 = smul.addr %s168, 16
      %s170 = smul.addr %s169, 4
      %s171 = scalar_lea.vmem %s0, %s170
      %p172 = pneg %p51
      %p173 = pneg %p48
      %p174 = pneg %p72
      %p175 = pneg %p69
      %p176 = pneg %p93
      %p177 = pneg %p90
      %p178 = pneg %p121
      %p179 = pneg %p118
      %p180 = scmp.lt.s32.totalorder %s18, 1
      %s181 = scalar_select %p180, %s18, 1
      %p182 = scmp.lt.s32.totalorder %s19, 1
      %s183 = scalar_select %p182, %s19, 1
      %s184 = smul.addr %s181, 2
      %s185 = sadd.s32 %s183, %s184
      %s186 = smul.addr %s185, 8
      %s187 = scalar_lea.vmem %s3, %s186
      %s188 = smul.u32 %s18, 2
      %s189 = sadd.s32 %s188, %s19
      %p190 = scmp.lt.s32.totalorder %s189, 3
      %s191 = scalar_select %p190, %s189, 3
      %s192 = smul.addr %s191, 16
      %s193 = smul.addr %s192, 4
      %s194 = scalar_lea.vmem %s0, %s193
      %s195 = smul.u32 %s18, 2
      %s196 = sadd.s32 %s195, %s19
      %p197 = scmp.lt.s32.totalorder %s18, 1
      %s198 = scalar_select %p197, %s18, 1
      %p199 = scmp.lt.s32.totalorder %s19, 1
      %s200 = scalar_select %p199, %s19, 1
      %s201 = smul.addr %s198, 2
      %s202 = sadd.s32 %s200, %s201
      %s203 = smul.addr %s202, 8
      %s204 = scalar_lea.vmem %s3, %s203
      %v205 = vld [vmem:[%s194] sm:$0xf]
      %v206 = vld [vmem:[%s194 + $0x4] sm:$0xf]
      %v207 = vld [vmem:[%s194 + $0x8] sm:$0xf]
      %v208 = vld [vmem:[%s194 + $0xc] sm:$0xf]
      %v209 = vld [vmem:[%s194 + $0x10] sm:$0xf]
      %v210 = vld [vmem:[%s194 + $0x14] sm:$0xf]
      %v211 = vld [vmem:[%s194 + $0x18] sm:$0xf]
      %v212 = vld [vmem:[%s194 + $0x1c] sm:$0xf]
      %v213 = vld [vmem:[%s194 + $0x20] sm:$0xf]
      %v214 = vld [vmem:[%s194 + $0x24] sm:$0xf]
      %v215 = vld [vmem:[%s194 + $0x28] sm:$0xf]
      %v216 = vld [vmem:[%s194 + $0x2c] sm:$0xf]
      %v217 = vld [vmem:[%s194 + $0x30] sm:$0xf]
      %v218 = vld [vmem:[%s194 + $0x34] sm:$0xf]
      %v219 = vld [vmem:[%s194 + $0x38] sm:$0xf]
      %v220 = vld [vmem:[%s194 + $0x3c] sm:$0xf]
      %v221 = vunpack.c.l.bf16 %v205
      %v222 = vunpack.c.l.bf16 %v206
      %v223 = vunpack.c.l.bf16 %v207
      %v224 = vunpack.c.l.bf16 %v208
      %v225 = vunpack.c.l.bf16 %v209
      %v226 = vunpack.c.l.bf16 %v210
      %v227 = vunpack.c.l.bf16 %v211
      %v228 = vunpack.c.l.bf16 %v212
      %v229 = vunpack.c.l.bf16 %v213
      %v230 = vunpack.c.l.bf16 %v214
      %v231 = vunpack.c.l.bf16 %v215
      %v232 = vunpack.c.l.bf16 %v216
      %v233 = vunpack.c.l.bf16 %v217
      %v234 = vunpack.c.l.bf16 %v218
      %v235 = vunpack.c.l.bf16 %v219
      %v236 = vunpack.c.l.bf16 %v220
      %v237 = vld [vmem:[%s1] sm:$0x1]
      %v239 = vlaneseq
      %v240 = vshrl.u32 %v239, 7
      %v241 = vsub.s32 0, %v240
      %v242 = vrot.slane %v237, %v241
      %v244 = vmul.f32 %v221, %v242
      %v245 = vmul.f32 %v222, %v242
      %v246 = vmul.f32 %v223, %v242
      %v247 = vmul.f32 %v224, %v242
      %v248 = vmul.f32 %v225, %v242
      %v249 = vmul.f32 %v226, %v242
      %v250 = vmul.f32 %v227, %v242
      %v251 = vmul.f32 %v228, %v242
      %v252 = vmul.f32 %v229, %v242
      %v253 = vmul.f32 %v230, %v242
      %v254 = vmul.f32 %v231, %v242
      %v255 = vmul.f32 %v232, %v242
      %v256 = vmul.f32 %v233, %v242
      %v257 = vmul.f32 %v234, %v242
      %v258 = vmul.f32 %v235, %v242
      %v259 = vmul.f32 %v236, %v242
      %v260 = vld [vmem:[%s2] sm:$0x1]
      %v262 = vlaneseq
      %v263 = vshrl.u32 %v262, 7
      %v264 = vsub.s32 0, %v263
      %v265 = vrot.slane %v260, %v264
      %v267 = vadd.f32 %v244, %v265
      %v268 = vadd.f32 %v245, %v265
      %v269 = vadd.f32 %v246, %v265
      %v270 = vadd.f32 %v247, %v265
      %v271 = vadd.f32 %v248, %v265
      %v272 = vadd.f32 %v249, %v265
      %v273 = vadd.f32 %v250, %v265
      %v274 = vadd.f32 %v251, %v265
      %v275 = vadd.f32 %v252, %v265
      %v276 = vadd.f32 %v253, %v265
      %v277 = vadd.f32 %v254, %v265
      %v278 = vadd.f32 %v255, %v265
      %v279 = vadd.f32 %v256, %v265
      %v280 = vadd.f32 %v257, %v265
      %v281 = vadd.f32 %v258, %v265
      %v282 = vadd.f32 %v259, %v265
      %vm283 = vcmp.ge.f32.partialorder %v267, 0.0
      %vm284 = vcmp.ge.f32.partialorder %v268, 0.0
      %vm285 = vcmp.ge.f32.partialorder %v269, 0.0
      %vm286 = vcmp.ge.f32.partialorder %v270, 0.0
      %vm287 = vcmp.ge.f32.partialorder %v271, 0.0
      %vm288 = vcmp.ge.f32.partialorder %v272, 0.0
      %vm289 = vcmp.ge.f32.partialorder %v273, 0.0
      %vm290 = vcmp.ge.f32.partialorder %v274, 0.0
      %vm291 = vcmp.ge.f32.partialorder %v275, 0.0
      %vm292 = vcmp.ge.f32.partialorder %v276, 0.0
      %vm293 = vcmp.ge.f32.partialorder %v277, 0.0
      %vm294 = vcmp.ge.f32.partialorder %v278, 0.0
      %vm295 = vcmp.ge.f32.partialorder %v279, 0.0
      %vm296 = vcmp.ge.f32.partialorder %v280, 0.0
      %vm297 = vcmp.ge.f32.partialorder %v281, 0.0
      %vm298 = vcmp.ge.f32.partialorder %v282, 0.0
      %v299 = vmul.f32 %v267, 0.1
      %v300 = vmul.f32 %v268, 0.1
      %v301 = vmul.f32 %v269, 0.1
      %v302 = vmul.f32 %v270, 0.1
      %v303 = vmul.f32 %v271, 0.1
      %v304 = vmul.f32 %v272, 0.1
      %v305 = vmul.f32 %v273, 0.1
      %v306 = vmul.f32 %v274, 0.1
      %v307 = vmul.f32 %v275, 0.1
      %v308 = vmul.f32 %v276, 0.1
      %v309 = vmul.f32 %v277, 0.1
      %v310 = vmul.f32 %v278, 0.1
      %v311 = vmul.f32 %v279, 0.1
      %v312 = vmul.f32 %v280, 0.1
      %v313 = vmul.f32 %v281, 0.1
      %v314 = vmul.f32 %v282, 0.1
      %v315 = vsel %vm283, %v267, %v299
      %v316 = vsel %vm284, %v268, %v300
      %v317 = vsel %vm285, %v269, %v301
      %v318 = vsel %vm286, %v270, %v302
      %v319 = vsel %vm287, %v271, %v303
      %v320 = vsel %vm288, %v272, %v304
      %v321 = vsel %vm289, %v273, %v305
      %v322 = vsel %vm290, %v274, %v306
      %v323 = vsel %vm291, %v275, %v307
      %v324 = vsel %vm292, %v276, %v308
      %v325 = vsel %vm293, %v277, %v309
      %v326 = vsel %vm294, %v278, %v310
      %v327 = vsel %vm295, %v279, %v311
      %v328 = vsel %vm296, %v280, %v312
      %v329 = vsel %vm297, %v281, %v313
      %v330 = vsel %vm298, %v282, %v314
      %331 = vxpose.xlu0.b32.start [1/16] %v315, 128
      %332 = vxpose.xlu0.b32.cont [2/16] %v316, 128
      %333 = vxpose.xlu0.b32.cont [3/16] %v317, 128
      %334 = vxpose.xlu0.b32.cont [4/16] %v318, 128
      %335 = vxpose.xlu0.b32.cont [5/16] %v319, 128
      %336 = vxpose.xlu0.b32.cont [6/16] %v320, 128
      %337 = vxpose.xlu0.b32.cont [7/16] %v321, 128
      %338 = vxpose.xlu0.b32.cont [8/16] %v322, 128
      %339 = vxpose.xlu0.b32.cont [9/16] %v323, 128
      %340 = vxpose.xlu0.b32.cont [10/16] %v324, 128
      %341 = vxpose.xlu0.b32.cont [11/16] %v325, 128
      %342 = vxpose.xlu0.b32.cont [12/16] %v326, 128
      %343 = vxpose.xlu0.b32.cont [13/16] %v327, 128
      %344 = vxpose.xlu0.b32.cont [14/16] %v328, 128
      %345 = vxpose.xlu0.b32.cont [15/16] %v329, 128
      %346 = vxpose.xlu0.b32.end [16/16] %v330, 128
      %v347 = vpop.trf.xlu0
      %v348 = vpop.trf.xlu0
      %v349 = vpop.trf.xlu0
      %v350 = vpop.trf.xlu0
      %v351 = vpop.trf.xlu0
      %v352 = vpop.trf.xlu0
      %v353 = vpop.trf.xlu0
      %v354 = vpop.trf.xlu0
      %v355 = vpop.trf.xlu0
      %v356 = vpop.trf.xlu0
      %v357 = vpop.trf.xlu0
      %v358 = vpop.trf.xlu0
      %v359 = vpop.trf.xlu0
      %v360 = vpop.trf.xlu0
      %v361 = vpop.trf.xlu0
      %v362 = vpop.trf.xlu0
      %363 = vst [vmem:[%s204] sm:$0xff] %v347
      %p364 = scmp.lt.s32.totalorder %s18, 1
      %s365 = scalar_select %p364, %s18, 1
      %p366 = scmp.lt.s32.totalorder %s19, 1
      %s367 = scalar_select %p366, %s19, 1
      %s368 = smul.addr %s365, 2
      %s369 = sadd.s32 %s367, %s368
      %s370 = smul.addr %s369, 8
      %s371 = scalar_lea.vmem %s3, %s370
      // Predicated region
      $region33: #{cnn_block.3} parent=31 // pred_check
        %p372 = pneg %p118
      $region34: #{cnn_block.3} parent=31 // pred_check_branch
        %374 = sbr.rel (%p372) target = $region36
      $region35: #{cnn_block.3} parent=31 // pred_region
        _
      $region36: #{cnn_block.3} parent=31 // pred_fallthru
        _
    $region32: #{cnn_block.3} parent=5 // pred_fallthru
      _
    %p375 = scmp.le.s32.totalorder 2, %s9
    // Predicated region
    $region37: #{cnn_block.3} parent=5 // pred_check
      %p376 = pneg %p375
    $region38: #{cnn_block.3} parent=5 // pred_check_branch
      %378 = sbr.rel (%p376) target = $region40
    $region39: #{cnn_block.3} parent=5 // pred_region
      %s379 = ssub.s32 %s9, 2
      // Predicated region
      $region41: #{cnn_block.3} parent=39 // pred_check
        %p380 = pneg %p124
      $region42: #{cnn_block.3} parent=39 // pred_check_branch
        %382 = sbr.rel (%p380) target = $region44
      $region43: #{cnn_block.3} parent=39 // pred_region
        %p383 = scmp.lt.s32.totalorder %s20, 1
        %s384 = scalar_select %p383, %s20, 1
        %p385 = scmp.lt.s32.totalorder %s21, 1
        %s386 = scalar_select %p385, %s21, 1
        %s387 = smul.addr %s384, 2
        %s388 = sadd.s32 %s386, %s387
        %s389 = smul.addr %s388, 8
        %s390 = scalar_lea.vmem %s3, %s389
      $region44: #{cnn_block.3} parent=39 // pred_fallthru
        _
    $region40: #{cnn_block.3} parent=5 // pred_fallthru
      _
  $region6: #{cnn_block.3} parent=0 // loop_footer
    %s13 = sadd.s32 1, %s9
  $region7: #{cnn_block.3} parent=0 // loop_footer_branch
    %8 = sbr.rel target = $region3
  $region8: #{cnn_block.3} parent=0 // loop_exit
    _

// kernel: cnn_block.2
$region0: #{cnn_block.2}
  #allocation0 [shape = 'u32[]', space=smem, size = 0x4, offset = 0x4, fixed_abs, tag = 'smem constant byte address 0x4 - core index']
  #allocation1 [shape = 'u32[144,128]{1,0:T(1,128)}', space=vmem, size = 0x12000, scoped, tag = 'internal scratch']
  %s0 = inlined_call_operand.vmem [shape: bf16[2,18,18,4], index: 0, kind: input, shape index: {}]
  %s1 = inlined_call_operand.vmem [shape: bf16[9,4,128], index: 1, kind: input, shape index: {}]
  %s2 = inlined_call_operand.vmem [shape: bf16[4,128,128], index: 2, kind: output, shape index: {0}]
  %s3 = inlined_call_operand.vmem [shape: f32[4,2,128], index: 3, kind: output, shape index: {1}]
  %4 = xla_tuple %s2, %s3
  %s5 = sld [smem:[#allocation0]]
  $region49: #{cnn_block.2} parent=0
    _
  %s7 = ssub.s32 1, %s5
  %s8 = scalar_select 0, %s7, %s5
  loop: start=0, step=1, limit=6
  $region2: #{cnn_block.2} parent=0 // loop_pre_header
    _
  $region3: #{cnn_block.2} parent=0 // loop_header
    %s10 = sphi 0, %s14
    %p11 = scmp.ge.s32.totalorder %s10, 6
    %s17 = sphi 0, %s29
    %s18 = sphi 0, %s25
    %s19 = sphi 0, %s17
    %s20 = sphi 0, %s18
    %s21 = sphi 0, %s19
    %s22 = sphi 0, %s20
    %s32 = sphi 0, %s34
    %s35 = sphi 0, %s32
    %s36 = sphi 0, %s35
    %s52 = sphi 0, %s36
    %s56 = sphi 0, %s56
    %s58 = sphi 0, %s56
    %s59 = sphi 0, %s58
    %s73 = sphi 0, %s59
    %s83 = sphi 0, %s85
    %s86 = sphi 0, %s83
    %s87 = sphi 0, %s86
    %s103 = sphi 0, %s87
    %s113 = sphi 0, %s115
    %s116 = sphi 0, %s113
    %s117 = sphi 0, %s116
    %s133 = sphi 0, %s117
  $region4: #{cnn_block.2} parent=0 // loop_header_branch
    %13 = sbr.rel (%p11) target = $region8
  $region5: #{cnn_block.2} parent=0 // loop_body
    %s15 = ssub.s32 %s10, 1
    %s16 = ssub.s32 %s10, 2
    %s23 = sadd.s32 1, %s18
    %p24 = scmp.ge.s32.totalorder %s23, 2
    %s25 = scalar_select %p24, 0, %s23
    %s26 = sadd.s32 1, %s17
    %s27 = scalar_select %p24, %s26, %s17
    %p28 = scmp.ge.s32.totalorder %s27, 2
    %s29 = scalar_select %p28, 0, %s27
    %s30 = ssub.s32 %s17, %s29
    %p31 = scmp.eq.s32.totalorder %s30, 0
    %s33 = sadd.s32 %s32, 1
    %s34 = scalar_select %p31, %s32, %s33
    %p37 = pneg %p31
    %p38 = scmp.eq.s32.totalorder %s10, 3
    %p39 = por %p37, %p38
    %p40 = scmp.ne.s32.totalorder %s32, %s35
    %p41 = scmp.eq.s32.totalorder %s10, 0
    %p42 = por %p40, %p41
    %p43 = scmp.ne.s32.totalorder %s32, %s35
    %p44 = scmp.eq.s32.totalorder %s15, 3
    %p45 = por %p43, %p44
    %p46 = scmp.ne.s32.totalorder %s35, %s36
    %p47 = scmp.eq.s32.totalorder %s15, 0
    %p48 = por %p46, %p47
    %p49 = scmp.ne.s32.totalorder %s35, %s36
    %p50 = scmp.eq.s32.totalorder %s16, 3
    %p51 = por %p49, %p50
    %p53 = scmp.ne.s32.totalorder %s36, %s52
    %p54 = scmp.eq.s32.totalorder %s16, 0
    %p55 = por %p53, %p54
    %s57 = sadd.s32 %s56, 1
    %p60 = scmp.eq.s32.totalorder %s10, 3
    %p61 = scmp.ne.s32.totalorder %s56, %s58
    %p62 = scmp.eq.s32.totalorder %s10, 0
    %p63 = por %p61, %p62
    %p64 = scmp.ne.s32.totalorder %s56, %s58
    %p65 = scmp.eq.s32.totalorder %s15, 3
    %p66 = por %p64, %p65
    %p67 = scmp.ne.s32.totalorder %s58, %s59
    %p68 = scmp.eq.s32.totalorder %s15, 0
    %p69 = por %p67, %p68
    %p70 = scmp.ne.s32.totalorder %s58, %s59
    %p71 = scmp.eq.s32.totalorder %s16, 3
    %p72 = por %p70, %p71
    %p74 = scmp.ne.s32.totalorder %s59, %s73
    %p75 = scmp.eq.s32.totalorder %s16, 0
    %p76 = por %p74, %p75
    %s77 = smul.u32 %s17, 2
    %s78 = sadd.s32 %s77, %s18
    %s79 = smul.u32 %s29, 2
    %s80 = sadd.s32 %s79, %s25
    %s81 = ssub.s32 %s78, %s80
    %p82 = scmp.eq.s32.totalorder %s81, 0
    %s84 = sadd.s32 %s83, 1
    %s85 = scalar_select %p82, %s83, %s84
    %p88 = pneg %p82
    %p89 = scmp.eq.s32.totalorder %s10, 3
    %p90 = por %p88, %p89
    %p91 = scmp.ne.s32.totalorder %s83, %s86
    %p92 = scmp.eq.s32.totalorder %s10, 0
    %p93 = por %p91, %p92
    %p94 = scmp.ne.s32.totalorder %s83, %s86
    %p95 = scmp.eq.s32.totalorder %s15, 3
    %p96 = por %p94, %p95
    %p97 = scmp.ne.s32.totalorder %s86, %s87
    %p98 = scmp.eq.s32.totalorder %s15, 0
    %p99 = por %p97, %p98
    %p100 = scmp.ne.s32.totalorder %s86, %s87
    %p101 = scmp.eq.s32.totalorder %s16, 3
    %p102 = por %p100, %p101
    %p104 = scmp.ne.s32.totalorder %s87, %s103
    %p105 = scmp.eq.s32.totalorder %s16, 0
    %p106 = por %p104, %p105
    %s107 = smul.u32 %s17, 2
    %s108 = sadd.s32 %s107, %s18
    %s109 = smul.u32 %s29, 2
    %s110 = sadd.s32 %s109, %s25
    %s111 = ssub.s32 %s108, %s110
    %p112 = scmp.eq.s32.totalorder %s111, 0
    %s114 = sadd.s32 %s113, 1
    %s115 = scalar_select %p112, %s113, %s114
    %p118 = pneg %p112
    %p119 = scmp.eq.s32.totalorder %s10, 3
    %p120 = por %p118, %p119
    %p121 = scmp.ne.s32.totalorder %s113, %s116
    %p122 = scmp.eq.s32.totalorder %s10, 0
    %p123 = por %p121, %p122
    %p124 = scmp.ne.s32.totalorder %s113, %s116
    %p125 = scmp.eq.s32.totalorder %s15, 3
    %p126 = por %p124, %p125
    %p127 = scmp.ne.s32.totalorder %s116, %s117
    %p128 = scmp.eq.s32.totalorder %s15, 0
    %p129 = por %p127, %p128
    %p130 = scmp.ne.s32.totalorder %s116, %s117
    %p131 = scmp.eq.s32.totalorder %s16, 3
    %p132 = por %p130, %p131
    %p134 = scmp.ne.s32.totalorder %s117, %s133
    %p135 = scmp.eq.s32.totalorder %s16, 0
    %p136 = por %p134, %p135
    %p137 = scmp.le.s32.totalorder 1, %s10
    %p138 = scmp.lt.s32.totalorder %s10, 5
    %p139 = pnand %p137, %p138
    %p140 = pneg %p139
    // Predicated region
    $region9: #{cnn_block.2} parent=5 // pred_check
      _
    $region10: #{cnn_block.2} parent=5 // pred_check_branch
      %142 = sbr.rel (%p139) target = $region12
    $region11: #{cnn_block.2} parent=5 // pred_region
      %s143 = ssub.s32 %s10, 1
      // Predicated region
      $region13: #{cnn_block.2} parent=11 // pred_check
        %p144 = pneg %p69
      $region14: #{cnn_block.2} parent=11 // pred_check_branch
        %146 = sbr.rel (%p144) target = $region16
      $region15: #{cnn_block.2} parent=11 // pred_region
        _
      $region16: #{cnn_block.2} parent=11 // pred_fallthru
        _
    $region12: #{cnn_block.2} parent=5 // pred_fallthru
      _
    %p147 = scmp.lt.s32.totalorder %s10, 4
    // Predicated region
    $region17: #{cnn_block.2} parent=5 // pred_check
      %p148 = pneg %p147
    $region18: #{cnn_block.2} parent=5 // pred_check_branch
      %150 = sbr.rel (%p148) target = $region20
    $region19: #{cnn_block.2} parent=5 // pred_region
      // Predicated region
      $region21: #{cnn_block.2} parent=19 // pred_check
        %p151 = pneg %p42
      $region22: #{cnn_block.2} parent=19 // pred_check_branch
        %153 = sbr.rel (%p151) target = $region24
      $region23: #{cnn_block.2} parent=19 // pred_region
        %p154 = scmp.lt.s32.totalorder %s17, 1
        %s155 = scalar_select %p154, %s17, 1
        %s156 = smul.addr %s155, 54
        %s157 = smul.addr %s156, 4
        %s158 = scalar_lea.vmem %s0, %s157
      $region24: #{cnn_block.2} parent=19 // pred_fallthru
        _
    $region20: #{cnn_block.2} parent=5 // pred_fallthru
      _
    %p159 = scmp.le.s32.totalorder 1, %s10
    %p160 = scmp.lt.s32.totalorder %s10, 5
    %p161 = pnand %p159, %p160
    %p162 = pneg %p161
    // Predicated region
    $region25: #{cnn_block.2} parent=5 // pred_check
      _
    $region26: #{cnn_block.2} parent=5 // pred_check_branch
      %164 = sbr.rel (%p161) target = $region28
    $region27: #{cnn_block.2} parent=5 // pred_region
      %s165 = ssub.s32 %s10, 1
      %p166 = scmp.lt.s32.totalorder %s19, 1
      %s167 = scalar_select %p166, %s19, 1
      %s168 = smul.addr %s167, 54
      %s169 = smul.addr %s168, 4
      %s170 = scalar_lea.vmem %s0, %s169
      %p171 = pneg %p48
      %p172 = pneg %p45
      %p173 = pneg %p69
      %p174 = pneg %p66
      %p175 = pneg %p99
      %p176 = pneg %p96
      %s177 = smul.u32 %s19, 2
      %s178 = sadd.s32 %s177, %s20
      %p179 = scmp.lt.s32.totalorder %s178, 3
      %s180 = scalar_select %p179, %s178, 3
      %s181 = smul.addr %s180, 16
      %s182 = smul.addr %s181, 4
      %s183 = scalar_lea.vmem %s2, %s182
      %p184 = pneg %p129
      %p185 = pneg %p126
      %s186 = smul.u32 %s19, 2
      %s187 = sadd.s32 %s186, %s20
      %p188 = scmp.lt.s32.totalorder %s187, 3
      %s189 = scalar_select %p188, %s187, 3
      %s190 = smul.addr %s189, 2
      %s191 = scalar_lea.vmem %s3, %s190
      %p192 = scmp.lt.s32.totalorder %s19, 1
      %s193 = scalar_select %p192, %s19, 1
      %s194 = smul.addr %s193, 54
      %s195 = smul.addr %s194, 4
      %s196 = scalar_lea.vmem %s0, %s195
      %s197 = smul.u32 %s19, 2
      %s198 = sadd.s32 %s197, %s20
      %p199 = scmp.lt.s32.totalorder %s198, 3
      %s200 = scalar_select %p199, %s198, 3
      %s201 = smul.addr %s200, 16
      %s202 = smul.addr %s201, 4
      %s203 = scalar_lea.vmem %s2, %s202
      %s204 = smul.u32 %s19, 2
      %s205 = sadd.s32 %s204, %s20
      %s206 = smul.u32 %s19, 2
      %s207 = sadd.s32 %s206, %s20
      %p208 = scmp.lt.s32.totalorder %s207, 3
      %s209 = scalar_select %p208, %s207, 3
      %s210 = smul.addr %s209, 2
      %s211 = scalar_lea.vmem %s3, %s210
      %s212 = smul.u32 %s19, 2
      %s213 = sadd.s32 %s212, %s20
      %s215 = smul.u32 %s20, 8
      %s216 = smul.u32 %s215, 3
      %s217 = smul.addr %s216, 4
      %s218 = scalar_lea.vmem %s196, %s217
      %v219 = vld [vmem:[%s218] sm:$0xf]
      %v220 = vld [vmem:[%s218 + $0x4] sm:$0xf]
      %v221 = vld [vmem:[%s218 + $0x8] sm:$0x1]
      %v222 = vld [vmem:[%s218 + $0xc] sm:$0xf]
      %v223 = vld [vmem:[%s218 + $0x10] sm:$0xf]
      %v224 = vld [vmem:[%s218 + $0x14] sm:$0x1]
      %v225 = vld [vmem:[%s218 + $0x18] sm:$0xf]
      %v226 = vld [vmem:[%s218 + $0x1c] sm:$0xf]
      %v227 = vld [vmem:[%s218 + $0x20] sm:$0x1]
      %v228 = vld [vmem:[%s218 + $0x24] sm:$0xf]
      %v229 = vld [vmem:[%s218 + $0x28] sm:$0xf]
      %v230 = vld [vmem:[%s218 + $0x2c] sm:$0x1]
      %v231 = vld [vmem:[%s218 + $0x30] sm:$0xf]
      %v232 = vld [vmem:[%s218 + $0x34] sm:$0xf]
      %v233 = vld [vmem:[%s218 + $0x38] sm:$0x1]
      %v234 = vld [vmem:[%s218 + $0x3c] sm:$0xf]
      %v235 = vld [vmem:[%s218 + $0x40] sm:$0xf]
      %v236 = vld [vmem:[%s218 + $0x44] sm:$0x1]
      %v237 = vld [vmem:[%s218 + $0x48] sm:$0xf]
      %v238 = vld [vmem:[%s218 + $0x4c] sm:$0xf]
      %v239 = vld [vmem:[%s218 + $0x50] sm:$0x1]
      %v240 = vld [vmem:[%s218 + $0x54] sm:$0xf]
      %v241 = vld [vmem:[%s218 + $0x58] sm:$0xf]
      %v242 = vld [vmem:[%s218 + $0x5c] sm:$0x1]
      %v243 = vld [vmem:[%s218 + $0x60] sm:$0xf]
      %v244 = vld [vmem:[%s218 + $0x64] sm:$0xf]
      %v245 = vld [vmem:[%s218 + $0x68] sm:$0x1]
      %v246 = vld [vmem:[%s218 + $0x6c] sm:$0xf]
      %v247 = vld [vmem:[%s218 + $0x70] sm:$0xf]
      %v248 = vld [vmem:[%s218 + $0x74] sm:$0x1]
      %v249 = vld [vmem:[%s1] sm:$0x3]
      %vm250 = vsmask.f32 3328
      %vm251 = vsmask.f32 7440
      %vm252 = vmor %vm250, %vm251
      %v254 = vshrl.u32 %v219, 16
      %v256 = vrot.slane %v254, 4
      %v257 = vshll.u32 %v219, 16
      %v259 = vrot.slane %v257, 5
      %v260 = vor.u32 %v256, %v259
      %v261 = vrot.slane %v260, 4
      %v263 = vshll.u32 %v220, 16
      %v265 = vrot.slane %v263, 5
      %v266 = vsel %vm252, %v261, %v265
      %v267 = vshrl.u32 %v220, 16
      %v269 = vrot.slane %v267, 4
      %v270 = vor.u32 %v269, %v265
      %v271 = vrot.slane %v270, 4
      %v273 = vshll.u32 %v221, 16
      %v275 = vrot.slane %v273, 5
      %v276 = vsel %vm252, %v271, %v275
      %v278 = vshrl.u32 %v222, 16
      %v280 = vrot.slane %v278, 4
      %v281 = vshll.u32 %v222, 16
      %v283 = vrot.slane %v281, 5
      %v284 = vor.u32 %v280, %v283
      %v285 = vrot.slane %v284, 4
      %v287 = vshll.u32 %v223, 16
      %v289 = vrot.slane %v287, 5
      %v290 = vsel %vm252, %v285, %v289
      %v291 = vshrl.u32 %v223, 16
      %v293 = vrot.slane %v291, 4
      %v294 = vor.u32 %v293, %v289
      %v295 = vrot.slane %v294, 4
      %v297 = vshll.u32 %v224, 16
      %v299 = vrot.slane %v297, 5
      %v300 = vsel %vm252, %v295, %v299
      %v302 = vshrl.u32 %v225, 16
      %v304 = vrot.slane %v302, 4
      %v305 = vshll.u32 %v225, 16
      %v307 = vrot.slane %v305, 5
      %v308 = vor.u32 %v304, %v307
      %v309 = vrot.slane %v308, 4
      %v311 = vshll.u32 %v226, 16
      %v313 = vrot.slane %v311, 5
      %v314 = vsel %vm252, %v309, %v313
      %v315 = vshrl.u32 %v226, 16
      %v317 = vrot.slane %v315, 4
      %v318 = vor.u32 %v317, %v313
      %v319 = vrot.slane %v318, 4
      %v321 = vshll.u32 %v227, 16
      %v323 = vrot.slane %v321, 5
      %v324 = vsel %vm252, %v319, %v323
      %v326 = vshrl.u32 %v228, 16
      %v328 = vrot.slane %v326, 4
      %v329 = vshll.u32 %v228, 16
      %v331 = vrot.slane %v329, 5
      %v332 = vor.u32 %v328, %v331
      %v333 = vrot.slane %v332, 4
      %v335 = vshll.u32 %v229, 16
      %v337 = vrot.slane %v335, 5
      %v338 = vsel %vm252, %v333, %v337
      %v339 = vshrl.u32 %v229, 16
      %v341 = vrot.slane %v339, 4
      %v342 = vor.u32 %v341, %v337
      %v343 = vrot.slane %v342, 4
      %v345 = vshll.u32 %v230, 16
      %v347 = vrot.slane %v345, 5
      %v348 = vsel %vm252, %v343, %v347
      %v350 = vshrl.u32 %v231, 16
      %v352 = vrot.slane %v350, 4
      %v353 = vshll.u32 %v231, 16
      %v355 = vrot.slane %v353, 5
      %v356 = vor.u32 %v352, %v355
      %v357 = vrot.slane %v356, 4
      %v359 = vshll.u32 %v232, 16
      %v361 = vrot.slane %v359, 5
      %v362 = vsel %vm252, %v357, %v361
      %v363 = vshrl.u32 %v232, 16
      %v365 = vrot.slane %v363, 4
      %v366 = vor.u32 %v365, %v361
      %v367 = vrot.slane %v366, 4
      %v369 = vshll.u32 %v233, 16
      %v371 = vrot.slane %v369, 5
      %v372 = vsel %vm252, %v367, %v371
      %v374 = vshrl.u32 %v234, 16
      %v376 = vrot.slane %v374, 4
      %v377 = vshll.u32 %v234, 16
      %v379 = vrot.slane %v377, 5
      %v380 = vor.u32 %v376, %v379
      %v381 = vrot.slane %v380, 4
      %v383 = vshll.u32 %v235, 16
      %v385 = vrot.slane %v383, 5
      %v386 = vsel %vm252, %v381, %v385
      %v387 = vshrl.u32 %v235, 16
      %v389 = vrot.slane %v387, 4
      %v390 = vor.u32 %v389, %v385
      %v391 = vrot.slane %v390, 4
      %v393 = vshll.u32 %v236, 16
      %v395 = vrot.slane %v393, 5
      %v396 = vsel %vm252, %v391, %v395
      %v398 = vshrl.u32 %v237, 16
      %v400 = vrot.slane %v398, 4
      %v401 = vshll.u32 %v237, 16
      %v403 = vrot.slane %v401, 5
      %v404 = vor.u32 %v400, %v403
      %v405 = vrot.slane %v404, 4
      %v407 = vshll.u32 %v238, 16
      %v409 = vrot.slane %v407, 5
      %v410 = vsel %vm252, %v405, %v409
      %v411 = vshrl.u32 %v238, 16
      %v413 = vrot.slane %v411, 4
      %v414 = vor.u32 %v413, %v409
      %v415 = vrot.slane %v414, 4
      %v417 = vshll.u32 %v239, 16
      %v419 = vrot.slane %v417, 5
      %v420 = vsel %vm252, %v415, %v419
      %v422 = vshrl.u32 %v240, 16
      %v424 = vrot.slane %v422, 4
      %v425 = vshll.u32 %v240, 16
      %v427 = vrot.slane %v425, 5
      %v428 = vor.u32 %v424, %v427
      %v429 = vrot.slane %v428, 4
      %v431 = vshll.u32 %v241, 16
      %v433 = vrot.slane %v431, 5
      %v434 = vsel %vm252, %v429, %v433
      %v435 = vshrl.u32 %v241, 16
      %v437 = vrot.slane %v435, 4
      %v438 = vor.u32 %v437, %v433
      %v439 = vrot.slane %v438, 4
      %v441 = vshll.u32 %v242, 16
      %v443 = vrot.slane %v441, 5
      %v444 = vsel %vm252, %v439, %v443
      %s445 = scalar_lea.vmem %s1, 2
      %v446 = vld [vmem:[%s445] sm:$0x3]
      %v447 = vunpack.c.l.b16 %v266
      %v448 = vunpack.c.l.b16 %v276
      %v449 = vunpack.c.l.b16 %v290
      %v450 = vunpack.c.l.b16 %v300
      %v451 = vunpack.c.l.b16 %v314
      %v452 = vunpack.c.l.b16 %v324
      %v453 = vunpack.c.l.b16 %v338
      %v454 = vunpack.c.l.b16 %v348
      %v455 = vunpack.c.l.b16 %v362
      %v456 = vunpack.c.l.b16 %v372
      %v457 = vunpack.c.l.b16 %v386
      %v458 = vunpack.c.l.b16 %v396
      %v459 = vunpack.c.l.b16 %v410
      %v460 = vunpack.c.l.b16 %v420
      %v461 = vunpack.c.l.b16 %v434
      %v462 = vunpack.c.l.b16 %v444
      %v463 = vpack.c.b16 %v448, %v447
      %v464 = vpack.c.b16 %v450, %v449
      %v465 = vpack.c.b16 %v452, %v451
      %v466 = vpack.c.b16 %v454, %v453
      %v467 = vpack.c.b16 %v456, %v455
      %v468 = vpack.c.b16 %v458, %v457
      %v469 = vpack.c.b16 %v460, %v459
      %v470 = vpack.c.b16 %v462, %v461
      %vm471 = vcmask 31744
      %v473 = vsel %vm471, %v463, 0
      %v476 = vsel %vm471, %v464, 0
      %v479 = vsel %vm471, %v465, 0
      %v482 = vsel %vm471, %v466, 0
      %v485 = vsel %vm471, %v467, 0
      %v488 = vsel %vm471, %v468, 0
      %v491 = vsel %vm471, %v469, 0
      %v494 = vsel %vm471, %v470, 0
      %vm496 = vcmask 1041408
      %v498 = vsel %vm496, %v446, 0
      %500 = vmatprep.subr.bf16.mxu0 0
      %501 = vmatpush1.bf16.msra.mxu0 %v498
      %502 = vmatprep.subr.bf16.mxu0 0
      %503 = vmatpush1.bf16.msra.mxu0 0
      %504 = vmatprep.subr.bf16.mxu0 0
      %505 = vmatpush1.bf16.msra.mxu0 0
      %506 = vmatprep.subr.bf16.mxu0 0
      %507 = vmatpush1.bf16.msra.mxu0 0
      %508 = vmatprep.subr.bf16.mxu0 0
      %509 = vmatpush1.bf16.msra.mxu0 0
      %510 = vmatprep.subr.bf16.mxu0 0
      %511 = vmatpush1.bf16.msra.mxu0 0
      %512 = vmatprep.subr.bf16.mxu0 0
      %513 = vmatpush1.bf16.msra.mxu0 0
      %514 = vmatprep.subr.bf16.mxu0 0
      %515 = vmatpush1.bf16.msra.mxu0 0
      %516 = vmatprep.subr.bf16.mxu0 0
      %517 = vmatpush1.bf16.msra.mxu0 0
      %518 = vmatprep.subr.bf16.mxu0 0
      %519 = vmatpush1.bf16.msra.mxu0 0
      %520 = vmatprep.subr.bf16.mxu0 0
      %521 = vmatpush1.bf16.msra.mxu0 0
      %522 = vmatprep.subr.bf16.mxu0 0
      %523 = vmatpush1.bf16.msra.mxu0 0
      %524 = vmatprep.subr.bf16.mxu0 0
      %525 = vmatpush1.bf16.msra.mxu0 0
      %526 = vmatprep.subr.bf16.mxu0 0
      %527 = vmatpush1.bf16.msra.mxu0 0
      %528 = vmatprep.subr.bf16.mxu0 0
      %529 = vmatpush1.bf16.msra.mxu0 0
      %530 = vmatprep.subr.bf16.mxu0 0
      %531 = vmatpush1.bf16.msra.mxu0 0
      %532 = vmatprep.mubr.bf16.mxu0 0
      %533 = vmatmul.mubr.bf16.gmra.mrb[0].mxu0 %v473
      %v534 = vpop.f32.mrb[0].mxu0
      %v535 = vadd.f32 0.0, %v534
      %v536 = vpop.f32.mrb[0].mxu0
      %v537 = vpop.f32.mrb[0].mxu0
      %v538 = vadd.f32 0.0, %v537
      %v539 = vpop.f32.mrb[0].mxu0
      %540 = vmatprep.mubr.bf16.mxu0 0
      %541 = vmatmul.mubr.bf16.gmra.mrb[0].mxu0 %v476
      %v542 = vpop.f32.mrb[0].mxu0
      %v543 = vadd.f32 0.0, %v542
      %v544 = vpop.f32.mrb[0].mxu0
      %v545 = vpop.f32.mrb[0].mxu0
      %v546 = vadd.f32 0.0, %v545
      %v547 = vpop.f32.mrb[0].mxu0
      %548 = vmatprep.mubr.bf16.mxu0 0
      %549 = vmatmul.mubr.bf16.gmra.mrb[0].mxu0 %v479
      %v550 = vpop.f32.mrb[0].mxu0
      %v551 = vadd.f32 0.0, %v550
      %v552 = vpop.f32.mrb[0].mxu0
      %v553 = vpop.f32.mrb[0].mxu0
      %v554 = vadd.f32 0.0, %v553
      %v555 = vpop.f32.mrb[0].mxu0
      %556 = vmatprep.mubr.bf16.mxu0 0
      %557 = vmatmul.mubr.bf16.gmra.mrb[0].mxu0 %v482
      %v558 = vpop.f32.mrb[0].mxu0
      %v559 = vadd.f32 0.0, %v558
      %v560 = vpop.f32.mrb[0].mxu0
      %v561 = vpop.f32.mrb[0].mxu0
      %v562 = vadd.f32 0.0, %v561
      %v563 = vpop.f32.mrb[0].mxu0
      %564 = vmatprep.mubr.bf16.mxu0 0
      %565 = vmatmul.mubr.bf16.gmra.mrb[0].mxu0 %v485
      %v566 = vpop.f32.mrb[0].mxu0
      %v567 = vadd.f32 0.0, %v566
      %v568 = vpop.f32.mrb[0].mxu0
      %v569 = vpop.f32.mrb[0].mxu0
      %v570 = vadd.f32 0.0, %v569
      %v571 = vpop.f32.mrb[0].mxu0
      %572 = vmatprep.mubr.bf16.mxu0 0
      %573 = vmatmul.mubr.bf16.gmra.mrb[0].mxu0 %v488
      %v574 = vpop.f32.mrb[0].mxu0
      %v575 = vadd.f32 0.0, %v574
      %v576 = vpop.f32.mrb[0].mxu0
      %v577 = vpop.f32.mrb[0].mxu0
      %v578 = vadd.f32 0.0, %v577
      %v579 = vpop.f32.mrb[0].mxu0
      %580 = vmatprep.mubr.bf16.mxu0 0
      %581 = vmatmul.mubr.bf16.gmra.mrb[0].mxu0 %v491
      %v582 = vpop.f32.mrb[0].mxu0
      %v583 = vadd.f32 0.0, %v582
      %v584 = vpop.f32.mrb[0].mxu0
      %v585 = vpop.f32.mrb[0].mxu0
      %v586 = vadd.f32 0.0, %v585
      %v587 = vpop.f32.mrb[0].mxu0
      %588 = vmatprep.mubr.bf16.mxu0 0
      %589 = vmatmul.mubr.bf16.gmra.mrb[0].mxu0 %v494
      %v590 = vpop.f32.mrb[0].mxu0
      %v591 = vadd.f32 0.0, %v590
      %v592 = vpop.f32.mrb[0].mxu0
      %v593 = vpop.f32.mrb[0].mxu0
      %v594 = vadd.f32 0.0, %v593
      %v595 = vpop.f32.mrb[0].mxu0
      %596 = vdwg.mxu0
      %v613 = vunpack.c.l.b16 %v219
      %v614 = vunpack.c.l.b16 %v220
      %v615 = vunpack.c.l.b16 %v222
      %v616 = vunpack.c.l.b16 %v223
      %v617 = vunpack.c.l.b16 %v225
      %v618 = vunpack.c.l.b16 %v226
      %v619 = vunpack.c.l.b16 %v228
      %v620 = vunpack.c.l.b16 %v229
      %v621 = vunpack.c.l.b16 %v231
      %v622 = vunpack.c.l.b16 %v232
      %v623 = vunpack.c.l.b16 %v234
      %v624 = vunpack.c.l.b16 %v235
      %v625 = vunpack.c.l.b16 %v237
      %v626 = vunpack.c.l.b16 %v238
      %v627 = vunpack.c.l.b16 %v240
      %v628 = vunpack.c.l.b16 %v241
      %v629 = vpack.c.b16 %v614, %v613
      %v630 = vpack.c.b16 %v616, %v615
      %v631 = vpack.c.b16 %v618, %v617
      %v632 = vpack.c.b16 %v620, %v619
      %v633 = vpack.c.b16 %v622, %v621
      %v634 = vpack.c.b16 %v624, %v623
      %v635 = vpack.c.b16 %v626, %v625
      %v636 = vpack.c.b16 %v628, %v627
      %v638 = vsel %vm471, %v629, 0
      %v641 = vsel %vm471, %v630, 0
      %v644 = vsel %vm471, %v631, 0
      %v647 = vsel %vm471, %v632, 0
      %v650 = vsel %vm471, %v633, 0
      %v653 = vsel %vm471, %v634, 0
      %v656 = vsel %vm471, %v635, 0
      %v659 = vsel %vm471, %v636, 0
      %v662 = vsel %vm496, %v249, 0
      %664 = vmatprep.subr.bf16.mxu0 0
      %665 = vmatpush1.bf16.msra.mxu0 %v662
      %666 = vmatprep.subr.bf16.mxu0 0
      %667 = vmatpush1.bf16.msra.mxu0 0
      %668 = vmatprep.subr.bf16.mxu0 0
      %669 = vmatpush1.bf16.msra.mxu0 0
      %670 = vmatprep.subr.bf16.mxu0 0
      %671 = vmatpush1.bf16.msra.mxu0 0
      %672 = vmatprep.subr.bf16.mxu0 0
      %673 = vmatpush1.bf16.msra.mxu0 0
      %674 = vmatprep.subr.bf16.mxu0 0
      %675 = vmatpush1.bf16.msra.mxu0 0
      %676 = vmatprep.subr.bf16.mxu0 0
      %677 = vmatpush1.bf16.msra.mxu0 0
      %678 = vmatprep.subr.bf16.mxu0 0
      %679 = vmatpush1.bf16.msra.mxu0 0
      %680 = vmatprep.subr.bf16.mxu0 0
      %681 = vmatpush1.bf16.msra.mxu0 0
      %682 = vmatprep.subr.bf16.mxu0 0
      %683 = vmatpush1.bf16.msra.mxu0 0
      %684 = vmatprep.subr.bf16.mxu0 0
      %685 = vmatpush1.bf16.msra.mxu0 0
      %686 = vmatprep.subr.bf16.mxu0 0
      %687 = vmatpush1.bf16.msra.mxu0 0
      %688 = vmatprep.subr.bf16.mxu0 0
      %689 = vmatpush1.bf16.msra.mxu0 0
      %690 = vmatprep.subr.bf16.mxu0 0
      %691 = vmatpush1.bf16.msra.mxu0 0
      %692 = vmatprep.subr.bf16.mxu0 0
      %693 = vmatpush1.bf16.msra.mxu0 0
      %694 = vmatprep.subr.bf16.mxu0 0
      %695 = vmatpush1.bf16.msra.mxu0 0
      %696 = vmatprep.mubr.bf16.mxu0 0
      %697 = vmatmul.mubr.bf16.gmra.mrb[0].mxu0 %v638
      %v698 = vpop.f32.mrb[0].mxu0
      %v699 = vadd.f32 %v535, %v698
      %v700 = vpop.f32.mrb[0].mxu0
      %v701 = vpop.f32.mrb[0].mxu0
      %v702 = vadd.f32 %v538, %v701
      %v703 = vpop.f32.mrb[0].mxu0
      %704 = vmatprep.mubr.bf16.mxu0 0
      %705 = vmatmul.mubr.bf16.gmra.mrb[0].mxu0 %v641
      %v706 = vpop.f32.mrb[0].mxu0
      %v707 = vadd.f32 %v543, %v706
      %v708 = vpop.f32.mrb[0].mxu0
      %v709 = vpop.f32.mrb[0].mxu0
      %v710 = vadd.f32 %v546, %v709
      %v711 = vpop.f32.mrb[0].mxu0
      %712 = vmatprep.mubr.bf16.mxu0 0
      %713 = vmatmul.mubr.bf16.gmra.mrb[0].mxu0 %v644
      %v714 = vpop.f32.mrb[0].mxu0
      %v715 = vadd.f32 %v551, %v714
      %v716 = vpop.f32.mrb[0].mxu0
      %v717 = vpop.f32.mrb[0].mxu0
      %v718 = vadd.f32 %v554, %v717
      %v719 = vpop.f32.mrb[0].mxu0
      %720 = vmatprep.mubr.bf16.mxu0 0
      %721 = vmatmul.mubr.bf16.gmra.mrb[0].mxu0 %v647
      %v722 = vpop.f32.mrb[0].mxu0
      %v723 = vadd.f32 %v559, %v722
      %v724 = vpop.f32.mrb[0].mxu0
      %v725 = vpop.f32.mrb[0].mxu0
      %v726 = vadd.f32 %v562, %v725
      %v727 = vpop.f32.mrb[0].mxu0
      %728 = vmatprep.mubr.bf16.mxu0 0
      %729 = vmatmul.mubr.bf16.gmra.mrb[0].mxu0 %v650
      %v730 = vpop.f32.mrb[0].mxu0
      %v731 = vadd.f32 %v567, %v730
      %v732 = vpop.f32.mrb[0].mxu0
      %v733 = vpop.f32.mrb[0].mxu0
      %v734 = vadd.f32 %v570, %v733
      %v735 = vpop.f32.mrb[0].mxu0
      %736 = vmatprep.mubr.bf16.mxu0 0
      %737 = vmatmul.mubr.bf16.gmra.mrb[0].mxu0 %v653
      %v738 = vpop.f32.mrb[0].mxu0
      %v739 = vadd.f32 %v575, %v738
      %v740 = vpop.f32.mrb[0].mxu0
      %v741 = vpop.f32.mrb[0].mxu0
      %v742 = vadd.f32 %v578, %v741
      %v743 = vpop.f32.mrb[0].mxu0
      %744 = vmatprep.mubr.bf16.mxu0 0
      %745 = vmatmul.mubr.bf16.gmra.mrb[0].mxu0 %v656
      %v746 = vpop.f32.mrb[0].mxu0
      %v747 = vadd.f32 %v583, %v746
      %v748 = vpop.f32.mrb[0].mxu0
      %v749 = vpop.f32.mrb[0].mxu0
      %v750 = vadd.f32 %v586, %v749
      %v751 = vpop.f32.mrb[0].mxu0
      %752 = vmatprep.mubr.bf16.mxu0 0
      %753 = vmatmul.mubr.bf16.gmra.mrb[0].mxu0 %v659
      %v754 = vpop.f32.mrb[0].mxu0
      %v755 = vadd.f32 %v591, %v754
      %v756 = vpop.f32.mrb[0].mxu0
      %v757 = vpop.f32.mrb[0].mxu0
      %v758 = vadd.f32 %v594, %v757
      %v759 = vpop.f32.mrb[0].mxu0
      %760 = vdwg.mxu0
      %vm769 = vcmask 1042432
      %vm770 = vcmask 1046532
      %vm771 = vmor %vm769, %vm770
      %v772 = vrot.slane %v219, 5
      %v773 = vrot.slane %v772, 4
      %v774 = vrot.slane %v220, 5
      %v775 = vsel %vm771, %v773, %v774
      %v776 = vrot.slane %v774, 4
      %v777 = vrot.slane %v221, 5
      %v778 = vsel %vm771, %v776, %v777
      %v779 = vrot.slane %v222, 5
      %v780 = vrot.slane %v779, 4
      %v781 = vrot.slane %v223, 5
      %v782 = vsel %vm771, %v780, %v781
      %v783 = vrot.slane %v781, 4
      %v784 = vrot.slane %v224, 5
      %v785 = vsel %vm771, %v783, %v784
      %v786 = vrot.slane %v225, 5
      %v787 = vrot.slane %v786, 4
      %v788 = vrot.slane %v226, 5
      %v789 = vsel %vm771, %v787, %v788
      %v790 = vrot.slane %v788, 4
      %v791 = vrot.slane %v227, 5
      %v792 = vsel %vm771, %v790, %v791
      %v793 = vrot.slane %v228, 5
      %v794 = vrot.slane %v793, 4
      %v795 = vrot.slane %v229, 5
      %v796 = vsel %vm771, %v794, %v795
      %v797 = vrot.slane %v795, 4
      %v798 = vrot.slane %v230, 5
      %v799 = vsel %vm771, %v797, %v798
      %v800 = vrot.slane %v231, 5
      %v801 = vrot.slane %v800, 4
      %v802 = vrot.slane %v232, 5
      %v803 = vsel %vm771, %v801, %v802
      %v804 = vrot.slane %v802, 4
      %v805 = vrot.slane %v233, 5
      %v806 = vsel %vm771, %v804, %v805
      %v807 = vrot.slane %v234, 5
      %v808 = vrot.slane %v807, 4
      %v809 = vrot.slane %v235, 5
      %v810 = vsel %vm771, %v808, %v809
      %v811 = vrot.slane %v809, 4
      %v812 = vrot.slane %v236, 5
      %v813 = vsel %vm771, %v811, %v812
      %v814 = vrot.slane %v237, 5
      %v815 = vrot.slane %v814, 4
      %v816 = vrot.slane %v238, 5
      %v817 = vsel %vm771, %v815, %v816
      %v818 = vrot.slane %v816, 4
      %v819 = vrot.slane %v239, 5
      %v820 = vsel %vm771, %v818, %v819
      %v821 = vrot.slane %v240, 5
      %v822 = vrot.slane %v821, 4
      %v823 = vrot.slane %v241, 5
      %v824 = vsel %vm771, %v822, %v823
      %v825 = vrot.slane %v823, 4
      %v826 = vrot.slane %v242, 5
      %v827 = vsel %vm771, %v825, %v826
      %s828 = scalar_lea.vmem %s1, 4
      %v829 = vld [vmem:[%s828] sm:$0x3]
      %v830 = vunpack.c.l.b16 %v775
      %v831 = vunpack.c.l.b16 %v778
      %v832 = vunpack.c.l.b16 %v782
      %v833 = vunpack.c.l.b16 %v785
      %v834 = vunpack.c.l.b16 %v789
      %v835 = vunpack.c.l.b16 %v792
      %v836 = vunpack.c.l.b16 %v796
      %v837 = vunpack.c.l.b16 %v799
      %v838 = vunpack.c.l.b16 %v803
      %v839 = vunpack.c.l.b16 %v806
      %v840 = vunpack.c.l.b16 %v810
      %v841 = vunpack.c.l.b16 %v813
      %v842 = vunpack.c.l.b16 %v817
      %v843 = vunpack.c.l.b16 %v820
      %v844 = vunpack.c.l.b16 %v824
      %v845 = vunpack.c.l.b16 %v827
      %v846 = vpack.c.b16 %v831, %v830
      %v847 = vpack.c.b16 %v833, %v832
      %v848 = vpack.c.b16 %v835, %v834
      %v849 = vpack.c.b16 %v837, %v836
      %v850 = vpack.c.b16 %v839, %v838
      %v851 = vpack.c.b16 %v841, %v840
      %v852 = vpack.c.b16 %v843, %v842
      %v853 = vpack.c.b16 %v845, %v844
      %v855 = vsel %vm471, %v846, 0
      %v858 = vsel %vm471, %v847, 0
      %v861 = vsel %vm471, %v848, 0
      %v864 = vsel %vm471, %v849, 0
      %v867 = vsel %vm471, %v850, 0
      %v870 = vsel %vm471, %v851, 0
      %v873 = vsel %vm471, %v852, 0
      %v876 = vsel %vm471, %v853, 0
      %v879 = vsel %vm496, %v829, 0
      %881 = vmatprep.subr.bf16.mxu0 0
      %882 = vmatpush1.bf16.msra.mxu0 %v879
      %883 = vmatprep.subr.bf16.mxu0 0
      %884 = vmatpush1.bf16.msra.mxu0 0
      %885 = vmatprep.subr.bf16.mxu0 0
      %886 = vmatpush1.bf16.msra.mxu0 0
      %887 = vmatprep.subr.bf16.mxu0 0
      %888 = vmatpush1.bf16.msra.mxu0 0
      %889 = vmatprep.subr.bf16.mxu0 0
      %890 = vmatpush1.bf16.msra.mxu0 0
      %891 = vmatprep.subr.bf16.mxu0 0
      %892 = vmatpush1.bf16.msra.mxu0 0
      %893 = vmatprep.subr.bf16.mxu0 0
      %894 = vmatpush1.bf16.msra.mxu0 0
      %895 = vmatprep.subr.bf16.mxu0 0
      %896 = vmatpush1.bf16.msra.mxu0 0
      %897 = vmatprep.subr.bf16.mxu0 0
      %898 = vmatpush1.bf16.msra.mxu0 0
      %899 = vmatprep.subr.bf16.mxu0 0
      %900 = vmatpush1.bf16.msra.mxu0 0
      %901 = vmatprep.subr.bf16.mxu0 0
      %902 = vmatpush1.bf16.msra.mxu0 0
      %903 = vmatprep.subr.bf16.mxu0 0
      %904 = vmatpush1.bf16.msra.mxu0 0
      %905 = vmatprep.subr.bf16.mxu0 0
      %906 = vmatpush1.bf16.msra.mxu0 0
      %907 = vmatprep.subr.bf16.mxu0 0
      %908 = vmatpush1.bf16.msra.mxu0 0
      %909 = vmatprep.subr.bf16.mxu0 0
      %910 = vmatpush1.bf16.msra.mxu0 0
      %911 = vmatprep.subr.bf16.mxu0 0
      %912 = vmatpush1.bf16.msra.mxu0 0
      %913 = vmatprep.mubr.bf16.mxu0 0
      %914 = vmatmul.mubr.bf16.gmra.mrb[0].mxu0 %v855
      %v915 = vpop.f32.mrb[0].mxu0
      %v916 = vadd.f32 0.0, %v915
      %v917 = vpop.f32.mrb[0].mxu0
      %v918 = vpop.f32.mrb[0].mxu0
      %v919 = vadd.f32 0.0, %v918
      %v920 = vpop.f32.mrb[0].mxu0
      %921 = vmatprep.mubr.bf16.mxu0 0
      %922 = vmatmul.mubr.bf16.gmra.mrb[0].mxu0 %v858
      %v923 = vpop.f32.mrb[0].mxu0
      %v924 = vadd.f32 0.0, %v923
      %v925 = vpop.f32.mrb[0].mxu0
      %v926 = vpop.f32.mrb[0].mxu0
      %v927 = vadd.f32 0.0, %v926
      %v928 = vpop.f32.mrb[0].mxu0
      %929 = vmatprep.mubr.bf16.mxu0 0
      %930 = vmatmul.mubr.bf16.gmra.mrb[0].mxu0 %v861
      %v931 = vpop.f32.mrb[0].mxu0
      %v932 = vadd.f32 0.0, %v931
      %v933 = vpop.f32.mrb[0].mxu0
      %v934 = vpop.f32.mrb[0].mxu0
      %v935 = vadd.f32 0.0, %v934
      %v936 = vpop.f32.mrb[0].mxu0
      %937 = vmatprep.mubr.bf16.mxu0 0
      %938 = vmatmul.mubr.bf16.gmra.mrb[0].mxu0 %v864
      %v939 = vpop.f32.mrb[0].mxu0
      %v940 = vadd.f32 0.0, %v939
      %v941 = vpop.f32.mrb[0].mxu0
      %v942 = vpop.f32.mrb[0].mxu0
      %v943 = vadd.f32 0.0, %v942
      %v944 = vpop.f32.mrb[0].mxu0
      %945 = vmatprep.mubr.bf16.mxu0 0
      %946 = vmatmul.mubr.bf16.gmra.mrb[0].mxu0 %v867
      %v947 = vpop.f32.mrb[0].mxu0
      %v948 = vadd.f32 0.0, %v947
      %v949 = vpop.f32.mrb[0].mxu0
      %v950 = vpop.f32.mrb[0].mxu0
      %v951 = vadd.f32 0.0, %v950
      %v952 = vpop.f32.mrb[0].mxu0
      %953 = vmatprep.mubr.bf16.mxu0 0
      %954 = vmatmul.mubr.bf16.gmra.mrb[0].mxu0 %v870
      %v955 = vpop.f32.mrb[0].mxu0
      %v956 = vadd.f32 0.0, %v955
      %v957 = vpop.f32.mrb[0].mxu0
      %v958 = vpop.f32.mrb[0].mxu0
      %v959 = vadd.f32 0.0, %v958
      %v960 = vpop.f32.mrb[0].mxu0
      %961 = vmatprep.mubr.bf16.mxu0 0
      %962 = vmatmul.mubr.bf16.gmra.mrb[0].mxu0 %v873
      %v963 = vpop.f32.mrb[0].mxu0
      %v964 = vadd.f32 0.0, %v963
      %v965 = vpop.f32.mrb[0].mxu0
      %v966 = vpop.f32.mrb[0].mxu0
      %v967 = vadd.f32 0.0, %v966
      %v968 = vpop.f32.mrb[0].mxu0
      %969 = vmatprep.mubr.bf16.mxu0 0
      %970 = vmatmul.mubr.bf16.gmra.mrb[0].mxu0 %v876
      %v971 = vpop.f32.mrb[0].mxu0
      %v972 = vadd.f32 0.0, %v971
      %v973 = vpop.f32.mrb[0].mxu0
      %v974 = vpop.f32.mrb[0].mxu0
      %v975 = vadd.f32 0.0, %v974
      %v976 = vpop.f32.mrb[0].mxu0
      %977 = vdwg.mxu0
      %v978 = vadd.f32 %v699, %v916
      %v979 = vadd.f32 %v702, %v919
      %v980 = vadd.f32 %v707, %v924
      %v981 = vadd.f32 %v710, %v927
      %v982 = vadd.f32 %v715, %v932
      %v983 = vadd.f32 %v718, %v935
      %v984 = vadd.f32 %v723, %v940
      %v985 = vadd.f32 %v726, %v943
      %v986 = vadd.f32 %v731, %v948
      %v987 = vadd.f32 %v734, %v951
      %v988 = vadd.f32 %v739, %v956
      %v989 = vadd.f32 %v742, %v959
      %v990 = vadd.f32 %v747, %v964
      %v991 = vadd.f32 %v750, %v967
      %v992 = vadd.f32 %v755, %v972
      %v993 = vadd.f32 %v758, %v975
      %s994 = scalar_lea.vmem %s1, 6
      %v995 = vld [vmem:[%s994] sm:$0x3]
      %v998 = vunpack.c.l.b16 %v243
      %v999 = vunpack.c.l.b16 %v244
      %v1000 = vpack.c.b16 %v999, %v998
      %v1002 = vsel %vm471, %v1000, 0
      %v1005 = vsel %vm496, %v995, 0
      %1007 = vmatprep.subr.bf16.mxu0 0
      %1008 = vmatpush1.bf16.msra.mxu0 %v1005
      %1009 = vmatprep.subr.bf16.mxu0 0
      %1010 = vmatpush1.bf16.msra.mxu0 0
      %1011 = vmatprep.subr.bf16.mxu0 0
      %1012 = vmatpush1.bf16.msra.mxu0 0
      %1013 = vmatprep.subr.bf16.mxu0 0
      %1014 = vmatpush1.bf16.msra.mxu0 0
      %1015 = vmatprep.subr.bf16.mxu0 0
      %1016 = vmatpush1.bf16.msra.mxu0 0
      %1017 = vmatprep.subr.bf16.mxu0 0
      %1018 = vmatpush1.bf16.msra.mxu0 0
      %1019 = vmatprep.subr.bf16.mxu0 0
      %1020 = vmatpush1.bf16.msra.mxu0 0
      %1021 = vmatprep.subr.bf16.mxu0 0
      %1022 = vmatpush1.bf16.msra.mxu0 0
      %1023 = vmatprep.subr.bf16.mxu0 0
      %1024 = vmatpush1.bf16.msra.mxu0 0
      %1025 = vmatprep.subr.bf16.mxu0 0
      %1026 = vmatpush1.bf16.msra.mxu0 0
      %1027 = vmatprep.subr.bf16.mxu0 0
      %1028 = vmatpush1.bf16.msra.mxu0 0
      %1029 = vmatprep.subr.bf16.mxu0 0
      %1030 = vmatpush1.bf16.msra.mxu0 0
      %1031 = vmatprep.subr.bf16.mxu0 0
      %1032 = vmatpush1.bf16.msra.mxu0 0
      %1033 = vmatprep.subr.bf16.mxu0 0
      %1034 = vmatpush1.bf16.msra.mxu0 0
      %1035 = vmatprep.subr.bf16.mxu0 0
      %1036 = vmatpush1.bf16.msra.mxu0 0
      %1037 = vmatprep.subr.bf16.mxu0 0
      %1038 = vmatpush1.bf16.msra.mxu0 0
      %1039 = vmatprep.mubr.bf16.mxu0 0
      %1040 = vmatmul.mubr.bf16.gmra.mrb[0].mxu0 %v641
      %v1041 = vpop.f32.mrb[0].mxu0
      %v1042 = vadd.f32 0.0, %v1041
      %v1043 = vpop.f32.mrb[0].mxu0
      %v1044 = vpop.f32.mrb[0].mxu0
      %v1045 = vadd.f32 0.0, %v1044
      %v1046 = vpop.f32.mrb[0].mxu0
      %1047 = vmatprep.mubr.bf16.mxu0 0
      %1048 = vmatmul.mubr.bf16.gmra.mrb[0].mxu0 %v644
      %v1049 = vpop.f32.mrb[0].mxu0
      %v1050 = vadd.f32 0.0, %v1049
      %v1051 = vpop.f32.mrb[0].mxu0
      %v1052 = vpop.f32.mrb[0].mxu0
      %v1053 = vadd.f32 0.0, %v1052
      %v1054 = vpop.f32.mrb[0].mxu0
      %1055 = vmatprep.mubr.bf16.mxu0 0
      %1056 = vmatmul.mubr.bf16.gmra.mrb[0].mxu0 %v647
      %v1057 = vpop.f32.mrb[0].mxu0
      %v1058 = vadd.f32 0.0, %v1057
      %v1059 = vpop.f32.mrb[0].mxu0
      %v1060 = vpop.f32.mrb[0].mxu0
      %v1061 = vadd.f32 0.0, %v1060
      %v1062 = vpop.f32.mrb[0].mxu0
      %1063 = vmatprep.mubr.bf16.mxu0 0
      %1064 = vmatmul.mubr.bf16.gmra.mrb[0].mxu0 %v650
      %v1065 = vpop.f32.mrb[0].mxu0
      %v1066 = vadd.f32 0.0, %v1065
      %v1067 = vpop.f32.mrb[0].mxu0
      %v1068 = vpop.f32.mrb[0].mxu0
      %v1069 = vadd.f32 0.0, %v1068
      %v1070 = vpop.f32.mrb[0].mxu0
      %1071 = vmatprep.mubr.bf16.mxu0 0
      %1072 = vmatmul.mubr.bf16.gmra.mrb[0].mxu0 %v653
      %v1073 = vpop.f32.mrb[0].mxu0
      %v1074 = vadd.f32 0.0, %v1073
      %v1075 = vpop.f32.mrb[0].mxu0
      %v1076 = vpop.f32.mrb[0].mxu0
      %v1077 = vadd.f32 0.0, %v1076
      %v1078 = vpop.f32.mrb[0].mxu0
      %1079 = vmatprep.mubr.bf16.mxu0 0
      %1080 = vmatmul.mubr.bf16.gmra.mrb[0].mxu0 %v656
      %v1081 = vpop.f32.mrb[0].mxu0
      %v1082 = vadd.f32 0.0, %v1081
      %v1083 = vpop.f32.mrb[0].mxu0
      %v1084 = vpop.f32.mrb[0].mxu0
      %v1085 = vadd.f32 0.0, %v1084
      %v1086 = vpop.f32.mrb[0].mxu0
      %1087 = vmatprep.mubr.bf16.mxu0 0
      %1088 = vmatmul.mubr.bf16.gmra.mrb[0].mxu0 %v659
      %v1089 = vpop.f32.mrb[0].mxu0
      %v1090 = vadd.f32 0.0, %v1089
      %v1091 = vpop.f32.mrb[0].mxu0
      %v1092 = vpop.f32.mrb[0].mxu0
      %v1093 = vadd.f32 0.0, %v1092
      %v1094 = vpop.f32.mrb[0].mxu0
      %1095 = vmatprep.mubr.bf16.mxu0 0
      %1096 = vmatmul.mubr.bf16.gmra.mrb[0].mxu0 %v1002
      %v1097 = vpop.f32.mrb[0].mxu0
      %v1098 = vadd.f32 0.0, %v1097
      %v1099 = vpop.f32.mrb[0].mxu0
      %v1100 = vpop.f32.mrb[0].mxu0
      %v1101 = vadd.f32 0.0, %v1100
      %v1102 = vpop.f32.mrb[0].mxu0
      %1103 = vdwg.mxu0
      %v1104 = vadd.f32 %v978, %v1042
      %v1105 = vadd.f32 %v979, %v1045
      %v1106 = vadd.f32 %v980, %v1050
      %v1107 = vadd.f32 %v981, %v1053
      %v1108 = vadd.f32 %v982, %v1058
      %v1109 = vadd.f32 %v983, %v1061
      %v1110 = vadd.f32 %v984, %v1066
      %v1111 = vadd.f32 %v985, %v1069
      %v1112 = vadd.f32 %v986, %v1074
      %v1113 = vadd.f32 %v987, %v1077
      %v1114 = vadd.f32 %v988, %v1082
      %v1115 = vadd.f32 %v989, %v1085
      %v1116 = vadd.f32 %v990, %v1090
      %v1117 = vadd.f32 %v991, %v1093
      %v1118 = vadd.f32 %v992, %v1098
      %v1119 = vadd.f32 %v993, %v1101
      %v1121 = vshrl.u32 %v243, 16
      %v1123 = vrot.slane %v1121, 4
      %v1124 = vshll.u32 %v243, 16
      %v1126 = vrot.slane %v1124, 5
      %v1127 = vor.u32 %v1123, %v1126
      %v1128 = vrot.slane %v1127, 4
      %v1130 = vshll.u32 %v244, 16
      %v1132 = vrot.slane %v1130, 5
      %v1133 = vsel %vm252, %v1128, %v1132
      %v1134 = vshrl.u32 %v244, 16
      %v1136 = vrot.slane %v1134, 4
      %v1137 = vor.u32 %v1136, %v1132
      %v1138 = vrot.slane %v1137, 4
      %v1140 = vshll.u32 %v245, 16
      %v1142 = vrot.slane %v1140, 5
      %v1143 = vsel %vm252, %v1138, %v1142
      %s1144 = scalar_lea.vmem %s1, 8
      %v1145 = vld [vmem:[%s1144] sm:$0x3]
      %v1146 = vunpack.c.l.b16 %v1133
      %v1147 = vunpack.c.l.b16 %v1143
      %v1148 = vpack.c.b16 %v1147, %v1146
      %v1150 = vsel %vm471, %v1148, 0
      %v1153 = vsel %vm496, %v1145, 0
      %1155 = vmatprep.subr.bf16.mxu0 0
      %1156 = vmatpush1.bf16.msra.mxu0 %v1153
      %1157 = vmatprep.subr.bf16.mxu0 0
      %1158 = vmatpush1.bf16.msra.mxu0 0
      %1159 = vmatprep.subr.bf16.mxu0 0
      %1160 = vmatpush1.bf16.msra.mxu0 0
      %1161 = vmatprep.subr.bf16.mxu0 0
      %1162 = vmatpush1.bf16.msra.mxu0 0
      %1163 = vmatprep.subr.bf16.mxu0 0
      %1164 = vmatpush1.bf16.msra.mxu0 0
      %1165 = vmatprep.subr.bf16.mxu0 0
      %1166 = vmatpush1.bf16.msra.mxu0 0
      %1167 = vmatprep.subr.bf16.mxu0 0
      %1168 = vmatpush1.bf16.msra.mxu0 0
      %1169 = vmatprep.subr.bf16.mxu0 0
      %1170 = vmatpush1.bf16.msra.mxu0 0
      %1171 = vmatprep.subr.bf16.mxu0 0
      %1172 = vmatpush1.bf16.msra.mxu0 0
      %1173 = vmatprep.subr.bf16.mxu0 0
      %1174 = vmatpush1.bf16.msra.mxu0 0
      %1175 = vmatprep.subr.bf16.mxu0 0
      %1176 = vmatpush1.bf16.msra.mxu0 0
      %1177 = vmatprep.subr.bf16.mxu0 0
      %1178 = vmatpush1.bf16.msra.mxu0 0
      %1179 = vmatprep.subr.bf16.mxu0 0
      %1180 = vmatpush1.bf16.msra.mxu0 0
      %1181 = vmatprep.subr.bf16.mxu0 0
      %1182 = vmatpush1.bf16.msra.mxu0 0
      %1183 = vmatprep.subr.bf16.mxu0 0
      %1184 = vmatpush1.bf16.msra.mxu0 0
      %1185 = vmatprep.subr.bf16.mxu0 0
      %1186 = vmatpush1.bf16.msra.mxu0 0
      %1187 = vmatprep.mubr.bf16.mxu0 0
      %1188 = vmatmul.mubr.bf16.gmra.mrb[0].mxu0 %v476
      %v1189 = vpop.f32.mrb[0].mxu0
      %v1190 = vadd.f32 0.0, %v1189
      %v1191 = vpop.f32.mrb[0].mxu0
      %v1192 = vpop.f32.mrb[0].mxu0
      %v1193 = vadd.f32 0.0, %v1192
      %v1194 = vpop.f32.mrb[0].mxu0
      %1195 = vmatprep.mubr.bf16.mxu0 0
      %1196 = vmatmul.mubr.bf16.gmra.mrb[0].mxu0 %v479
      %v1197 = vpop.f32.mrb[0].mxu0
      %v1198 = vadd.f32 0.0, %v1197
      %v1199 = vpop.f32.mrb[0].mxu0
      %v1200 = vpop.f32.mrb[0].mxu0
      %v1201 = vadd.f32 0.0, %v1200
      %v1202 = vpop.f32.mrb[0].mxu0
      %1203 = vmatprep.mubr.bf16.mxu0 0
      %1204 = vmatmul.mubr.bf16.gmra.mrb[0].mxu0 %v482
      %v1205 = vpop.f32.mrb[0].mxu0
      %v1206 = vadd.f32 0.0, %v1205
      %v1207 = vpop.f32.mrb[0].mxu0
      %v1208 = vpop.f32.mrb[0].mxu0
      %v1209 = vadd.f32 0.0, %v1208
      %v1210 = vpop.f32.mrb[0].mxu0
      %1211 = vmatprep.mubr.bf16.mxu0 0
      %1212 = vmatmul.mubr.bf16.gmra.mrb[0].mxu0 %v485
      %v1213 = vpop.f32.mrb[0].mxu0
      %v1214 = vadd.f32 0.0, %v1213
      %v1215 = vpop.f32.mrb[0].mxu0
      %v1216 = vpop.f32.mrb[0].mxu0
      %v1217 = vadd.f32 0.0, %v1216
      %v1218 = vpop.f32.mrb[0].mxu0
      %1219 = vmatprep.mubr.bf16.mxu0 0
      %1220 = vmatmul.mubr.bf16.gmra.mrb[0].mxu0 %v488
      %v1221 = vpop.f32.mrb[0].mxu0
      %v1222 = vadd.f32 0.0, %v1221
      %v1223 = vpop.f32.mrb[0].mxu0
      %v1224 = vpop.f32.mrb[0].mxu0
      %v1225 = vadd.f32 0.0, %v1224
      %v1226 = vpop.f32.mrb[0].mxu0
      %1227 = vmatprep.mubr.bf16.mxu0 0
      %1228 = vmatmul.mubr.bf16.gmra.mrb[0].mxu0 %v491
      %v1229 = vpop.f32.mrb[0].mxu0
      %v1230 = vadd.f32 0.0, %v1229
      %v1231 = vpop.f32.mrb[0].mxu0
      %v1232 = vpop.f32.mrb[0].mxu0
      %v1233 = vadd.f32 0.0, %v1232
      %v1234 = vpop.f32.mrb[0].mxu0
      %1235 = vmatprep.mubr.bf16.mxu0 0
      %1236 = vmatmul.mubr.bf16.gmra.mrb[0].mxu0 %v494
      %v1237 = vpop.f32.mrb[0].mxu0
      %v1238 = vadd.f32 0.0, %v1237
      %v1239 = vpop.f32.mrb[0].mxu0
      %v1240 = vpop.f32.mrb[0].mxu0
      %v1241 = vadd.f32 0.0, %v1240
      %v1242 = vpop.f32.mrb[0].mxu0
      %1243 = vmatprep.mubr.bf16.mxu0 0
      %1244 = vmatmul.mubr.bf16.gmra.mrb[0].mxu0 %v1150
      %v1245 = vpop.f32.mrb[0].mxu0
      %v1246 = vadd.f32 0.0, %v1245
      %v1247 = vpop.f32.mrb[0].mxu0
      %v1248 = vpop.f32.mrb[0].mxu0
      %v1249 = vadd.f32 0.0, %v1248
      %v1250 = vpop.f32.mrb[0].mxu0
      %1251 = vdwg.mxu0
      %v1252 = vadd.f32 %v1104, %v1190
      %v1253 = vadd.f32 %v1105, %v1193
      %v1254 = vadd.f32 %v1106, %v1198
      %v1255 = vadd.f32 %v1107, %v1201
      %v1256 = vadd.f32 %v1108, %v1206
      %v1257 = vadd.f32 %v1109, %v1209
      %v1258 = vadd.f32 %v1110, %v1214
      %v1259 = vadd.f32 %v1111, %v1217
      %v1260 = vadd.f32 %v1112, %v1222
      %v1261 = vadd.f32 %v1113, %v1225
      %v1262 = vadd.f32 %v1114, %v1230
      %v1263 = vadd.f32 %v1115, %v1233
      %v1264 = vadd.f32 %v1116, %v1238
      %v1265 = vadd.f32 %v1117, %v1241
      %v1266 = vadd.f32 %v1118, %v1246
      %v1267 = vadd.f32 %v1119, %v1249
      %v1269 = vrot.slane %v243, 5
      %v1270 = vrot.slane %v1269, 4
      %v1271 = vrot.slane %v244, 5
      %v1272 = vsel %vm771, %v1270, %v1271
      %v1273 = vrot.slane %v1271, 4
      %v1274 = vrot.slane %v245, 5
      %v1275 = vsel %vm771, %v1273, %v1274
      %s1276 = scalar_lea.vmem %s1, 10
      %v1277 = vld [vmem:[%s1276] sm:$0x3]
      %v1278 = vunpack.c.l.b16 %v1272
      %v1279 = vunpack.c.l.b16 %v1275
      %v1280 = vpack.c.b16 %v1279, %v1278
      %v1282 = vsel %vm471, %v1280, 0
      %v1285 = vsel %vm496, %v1277, 0
      %1287 = vmatprep.subr.bf16.mxu0 0
      %1288 = vmatpush1.bf16.msra.mxu0 %v1285
      %1289 = vmatprep.subr.bf16.mxu0 0
      %1290 = vmatpush1.bf16.msra.mxu0 0
      %1291 = vmatprep.subr.bf16.mxu0 0
      %1292 = vmatpush1.bf16.msra.mxu0 0
      %1293 = vmatprep.subr.bf16.mxu0 0
      %1294 = vmatpush1.bf16.msra.mxu0 0
      %1295 = vmatprep.subr.bf16.mxu0 0
      %1296 = vmatpush1.bf16.msra.mxu0 0
      %1297 = vmatprep.subr.bf16.mxu0 0
      %1298 = vmatpush1.bf16.msra.mxu0 0
      %1299 = vmatprep.subr.bf16.mxu0 0
      %1300 = vmatpush1.bf16.msra.mxu0 0
      %1301 = vmatprep.subr.bf16.mxu0 0
      %1302 = vmatpush1.bf16.msra.mxu0 0
      %1303 = vmatprep.subr.bf16.mxu0 0
      %1304 = vmatpush1.bf16.msra.mxu0 0
      %1305 = vmatprep.subr.bf16.mxu0 0
      %1306 = vmatpush1.bf16.msra.mxu0 0
      %1307 = vmatprep.subr.bf16.mxu0 0
      %1308 = vmatpush1.bf16.msra.mxu0 0
      %1309 = vmatprep.subr.bf16.mxu0 0
      %1310 = vmatpush1.bf16.msra.mxu0 0
      %1311 = vmatprep.subr.bf16.mxu0 0
      %1312 = vmatpush1.bf16.msra.mxu0 0
      %1313 = vmatprep.subr.bf16.mxu0 0
      %1314 = vmatpush1.bf16.msra.mxu0 0
      %1315 = vmatprep.subr.bf16.mxu0 0
      %1316 = vmatpush1.bf16.msra.mxu0 0
      %1317 = vmatprep.subr.bf16.mxu0 0
      %1318 = vmatpush1.bf16.msra.mxu0 0
      %1319 = vmatprep.mubr.bf16.mxu0 0
      %1320 = vmatmul.mubr.bf16.gmra.mrb[0].mxu0 %v858
      %v1321 = vpop.f32.mrb[0].mxu0
      %v1322 = vadd.f32 0.0, %v1321
      %v1323 = vpop.f32.mrb[0].mxu0
      %v1324 = vpop.f32.mrb[0].mxu0
      %v1325 = vadd.f32 0.0, %v1324
      %v1326 = vpop.f32.mrb[0].mxu0
      %1327 = vmatprep.mubr.bf16.mxu0 0
      %1328 = vmatmul.mubr.bf16.gmra.mrb[0].mxu0 %v861
      %v1329 = vpop.f32.mrb[0].mxu0
      %v1330 = vadd.f32 0.0, %v1329
      %v1331 = vpop.f32.mrb[0].mxu0
      %v1332 = vpop.f32.mrb[0].mxu0
      %v1333 = vadd.f32 0.0, %v1332
      %v1334 = vpop.f32.mrb[0].mxu0
      %1335 = vmatprep.mubr.bf16.mxu0 0
      %1336 = vmatmul.mubr.bf16.gmra.mrb[0].mxu0 %v864
      %v1337 = vpop.f32.mrb[0].mxu0
      %v1338 = vadd.f32 0.0, %v1337
      %v1339 = vpop.f32.mrb[0].mxu0
      %v1340 = vpop.f32.mrb[0].mxu0
      %v1341 = vadd.f32 0.0, %v1340
      %v1342 = vpop.f32.mrb[0].mxu0
      %1343 = vmatprep.mubr.bf16.mxu0 0
      %1344 = vmatmul.mubr.bf16.gmra.mrb[0].mxu0 %v867
      %v1345 = vpop.f32.mrb[0].mxu0
      %v1346 = vadd.f32 0.0, %v1345
      %v1347 = vpop.f32.mrb[0].mxu0
      %v1348 = vpop.f32.mrb[0].mxu0
      %v1349 = vadd.f32 0.0, %v1348
      %v1350 = vpop.f32.mrb[0].mxu0
      %1351 = vmatprep.mubr.bf16.mxu0 0
      %1352 = vmatmul.mubr.bf16.gmra.mrb[0].mxu0 %v870
      %v1353 = vpop.f32.mrb[0].mxu0
      %v1354 = vadd.f32 0.0, %v1353
      %v1355 = vpop.f32.mrb[0].mxu0
      %v1356 = vpop.f32.mrb[0].mxu0
      %v1357 = vadd.f32 0.0, %v1356
      %v1358 = vpop.f32.mrb[0].mxu0
      %1359 = vmatprep.mubr.bf16.mxu0 0
      %1360 = vmatmul.mubr.bf16.gmra.mrb[0].mxu0 %v873
      %v1361 = vpop.f32.mrb[0].mxu0
      %v1362 = vadd.f32 0.0, %v1361
      %v1363 = vpop.f32.mrb[0].mxu0
      %v1364 = vpop.f32.mrb[0].mxu0
      %v1365 = vadd.f32 0.0, %v1364
      %v1366 = vpop.f32.mrb[0].mxu0
      %1367 = vmatprep.mubr.bf16.mxu0 0
      %1368 = vmatmul.mubr.bf16.gmra.mrb[0].mxu0 %v876
      %v1369 = vpop.f32.mrb[0].mxu0
      %v1370 = vadd.f32 0.0, %v1369
      %v1371 = vpop.f32.mrb[0].mxu0
      %v1372 = vpop.f32.mrb[0].mxu0
      %v1373 = vadd.f32 0.0, %v1372
      %v1374 = vpop.f32.mrb[0].mxu0
      %1375 = vmatprep.mubr.bf16.mxu0 0
      %1376 = vmatmul.mubr.bf16.gmra.mrb[0].mxu0 %v1282
      %v1377 = vpop.f32.mrb[0].mxu0
      %v1378 = vadd.f32 0.0, %v1377
      %v1379 = vpop.f32.mrb[0].mxu0
      %v1380 = vpop.f32.mrb[0].mxu0
      %v1381 = vadd.f32 0.0, %v1380
      %v1382 = vpop.f32.mrb[0].mxu0
      %1383 = vdwg.mxu0
      %v1384 = vadd.f32 %v1252, %v1322
      %v1385 = vadd.f32 %v1253, %v1325
      %v1386 = vadd.f32 %v1254, %v1330
      %v1387 = vadd.f32 %v1255, %v1333
      %v1388 = vadd.f32 %v1256, %v1338
      %v1389 = vadd.f32 %v1257, %v1341
      %v1390 = vadd.f32 %v1258, %v1346
      %v1391 = vadd.f32 %v1259, %v1349
      %v1392 = vadd.f32 %v1260, %v1354
      %v1393 = vadd.f32 %v1261, %v1357
      %v1394 = vadd.f32 %v1262, %v1362
      %v1395 = vadd.f32 %v1263, %v1365
      %v1396 = vadd.f32 %v1264, %v1370
      %v1397 = vadd.f32 %v1265, %v1373
      %v1398 = vadd.f32 %v1266, %v1378
      %v1399 = vadd.f32 %v1267, %v1381
      %s1400 = scalar_lea.vmem %s1, 12
      %v1401 = vld [vmem:[%s1400] sm:$0x3]
      %v1404 = vunpack.c.l.b16 %v246
      %v1405 = vunpack.c.l.b16 %v247
      %v1406 = vpack.c.b16 %v1405, %v1404
      %v1408 = vsel %vm471, %v1406, 0
      %v1411 = vsel %vm496, %v1401, 0
      %1413 = vmatprep.subr.bf16.mxu0 0
      %1414 = vmatpush1.bf16.msra.mxu0 %v1411
      %1415 = vmatprep.subr.bf16.mxu0 0
      %1416 = vmatpush1.bf16.msra.mxu0 0
      %1417 = vmatprep.subr.bf16.mxu0 0
      %1418 = vmatpush1.bf16.msra.mxu0 0
      %1419 = vmatprep.subr.bf16.mxu0 0
      %1420 = vmatpush1.bf16.msra.mxu0 0
      %1421 = vmatprep.subr.bf16.mxu0 0
      %1422 = vmatpush1.bf16.msra.mxu0 0
      %1423 = vmatprep.subr.bf16.mxu0 0
      %1424 = vmatpush1.bf16.msra.mxu0 0
      %1425 = vmatprep.subr.bf16.mxu0 0
      %1426 = vmatpush1.bf16.msra.mxu0 0
      %1427 = vmatprep.subr.bf16.mxu0 0
      %1428 = vmatpush1.bf16.msra.mxu0 0
      %1429 = vmatprep.subr.bf16.mxu0 0
      %1430 = vmatpush1.bf16.msra.mxu0 0
      %1431 = vmatprep.subr.bf16.mxu0 0
      %1432 = vmatpush1.bf16.msra.mxu0 0
      %1433 = vmatprep.subr.bf16.mxu0 0
      %1434 = vmatpush1.bf16.msra.mxu0 0
      %1435 = vmatprep.subr.bf16.mxu0 0
      %1436 = vmatpush1.bf16.msra.mxu0 0
      %1437 = vmatprep.subr.bf16.mxu0 0
      %1438 = vmatpush1.bf16.msra.mxu0 0
      %1439 = vmatprep.subr.bf16.mxu0 0
      %1440 = vmatpush1.bf16.msra.mxu0 0
      %1441 = vmatprep.subr.bf16.mxu0 0
      %1442 = vmatpush1.bf16.msra.mxu0 0
      %1443 = vmatprep.subr.bf16.mxu0 0
      %1444 = vmatpush1.bf16.msra.mxu0 0
      %1445 = vmatprep.mubr.bf16.mxu0 0
      %1446 = vmatmul.mubr.bf16.gmra.mrb[0].mxu0 %v644
      %v1447 = vpop.f32.mrb[0].mxu0
      %v1448 = vadd.f32 0.0, %v1447
      %v1449 = vpop.f32.mrb[0].mxu0
      %v1450 = vpop.f32.mrb[0].mxu0
      %v1451 = vadd.f32 0.0, %v1450
      %v1452 = vpop.f32.mrb[0].mxu0
      %1453 = vmatprep.mubr.bf16.mxu0 0
      %1454 = vmatmul.mubr.bf16.gmra.mrb[0].mxu0 %v647
      %v1455 = vpop.f32.mrb[0].mxu0
      %v1456 = vadd.f32 0.0, %v1455
      %v1457 = vpop.f32.mrb[0].mxu0
      %v1458 = vpop.f32.mrb[0].mxu0
      %v1459 = vadd.f32 0.0, %v1458
      %v1460 = vpop.f32.mrb[0].mxu0
      %1461 = vmatprep.mubr.bf16.mxu0 0
      %1462 = vmatmul.mubr.bf16.gmra.mrb[0].mxu0 %v650
      %v1463 = vpop.f32.mrb[0].mxu0
      %v1464 = vadd.f32 0.0, %v1463
      %v1465 = vpop.f32.mrb[0].mxu0
      %v1466 = vpop.f32.mrb[0].mxu0
      %v1467 = vadd.f32 0.0, %v1466
      %v1468 = vpop.f32.mrb[0].mxu0
      %1469 = vmatprep.mubr.bf16.mxu0 0
      %1470 = vmatmul.mubr.bf16.gmra.mrb[0].mxu0 %v653
      %v1471 = vpop.f32.mrb[0].mxu0
      %v1472 = vadd.f32 0.0, %v1471
      %v1473 = vpop.f32.mrb[0].mxu0
      %v1474 = vpop.f32.mrb[0].mxu0
      %v1475 = vadd.f32 0.0, %v1474
      %v1476 = vpop.f32.mrb[0].mxu0
      %1477 = vmatprep.mubr.bf16.mxu0 0
      %1478 = vmatmul.mubr.bf16.gmra.mrb[0].mxu0 %v656
      %v1479 = vpop.f32.mrb[0].mxu0
      %v1480 = vadd.f32 0.0, %v1479
      %v1481 = vpop.f32.mrb[0].mxu0
      %v1482 = vpop.f32.mrb[0].mxu0
      %v1483 = vadd.f32 0.0, %v1482
      %v1484 = vpop.f32.mrb[0].mxu0
      %1485 = vmatprep.mubr.bf16.mxu0 0
      %1486 = vmatmul.mubr.bf16.gmra.mrb[0].mxu0 %v659
      %v1487 = vpop.f32.mrb[0].mxu0
      %v1488 = vadd.f32 0.0, %v1487
      %v1489 = vpop.f32.mrb[0].mxu0
      %v1490 = vpop.f32.mrb[0].mxu0
      %v1491 = vadd.f32 0.0, %v1490
      %v1492 = vpop.f32.mrb[0].mxu0
      %1493 = vmatprep.mubr.bf16.mxu0 0
      %1494 = vmatmul.mubr.bf16.gmra.mrb[0].mxu0 %v1002
      %v1495 = vpop.f32.mrb[0].mxu0
      %v1496 = vadd.f32 0.0, %v1495
      %v1497 = vpop.f32.mrb[0].mxu0
      %v1498 = vpop.f32.mrb[0].mxu0
      %v1499 = vadd.f32 0.0, %v1498
      %v1500 = vpop.f32.mrb[0].mxu0
      %1501 = vmatprep.mubr.bf16.mxu0 0
      %1502 = vmatmul.mubr.bf16.gmra.mrb[0].mxu0 %v1408
      %v1503 = vpop.f32.mrb[0].mxu0
      %v1504 = vadd.f32 0.0, %v1503
      %v1505 = vpop.f32.mrb[0].mxu0
      %v1506 = vpop.f32.mrb[0].mxu0
      %v1507 = vadd.f32 0.0, %v1506
      %v1508 = vpop.f32.mrb[0].mxu0
      %1509 = vdwg.mxu0
      %v1510 = vadd.f32 %v1384, %v1448
      %v1511 = vadd.f32 %v1385, %v1451
      %v1512 = vadd.f32 %v1386, %v1456
      %v1513 = vadd.f32 %v1387, %v1459
      %v1514 = vadd.f32 %v1388, %v1464
      %v1515 = vadd.f32 %v1389, %v1467
      %v1516 = vadd.f32 %v1390, %v1472
      %v1517 = vadd.f32 %v1391, %v1475
      %v1518 = vadd.f32 %v1392, %v1480
      %v1519 = vadd.f32 %v1393, %v1483
      %v1520 = vadd.f32 %v1394, %v1488
      %v1521 = vadd.f32 %v1395, %v1491
      %v1522 = vadd.f32 %v1396, %v1496
      %v1523 = vadd.f32 %v1397, %v1499
      %v1524 = vadd.f32 %v1398, %v1504
      %v1525 = vadd.f32 %v1399, %v1507
      %v1527 = vshrl.u32 %v246, 16
      %v1529 = vrot.slane %v1527, 4
      %v1530 = vshll.u32 %v246, 16
      %v1532 = vrot.slane %v1530, 5
      %v1533 = vor.u32 %v1529, %v1532
      %v1534 = vrot.slane %v1533, 4
      %v1536 = vshll.u32 %v247, 16
      %v1538 = vrot.slane %v1536, 5
      %v1539 = vsel %vm252, %v1534, %v1538
      %v1540 = vshrl.u32 %v247, 16
      %v1542 = vrot.slane %v1540, 4
      %v1543 = vor.u32 %v1542, %v1538
      %v1544 = vrot.slane %v1543, 4
      %v1546 = vshll.u32 %v248, 16
      %v1548 = vrot.slane %v1546, 5
      %v1549 = vsel %vm252, %v1544, %v1548
      %s1550 = scalar_lea.vmem %s1, 14
      %v1551 = vld [vmem:[%s1550] sm:$0x3]
      %v1552 = vunpack.c.l.b16 %v1539
      %v1553 = vunpack.c.l.b16 %v1549
      %v1554 = vpack.c.b16 %v1553, %v1552
      %v1556 = vsel %vm471, %v1554, 0
      %v1559 = vsel %vm496, %v1551, 0
      %1561 = vmatprep.subr.bf16.mxu0 0
      %1562 = vmatpush1.bf16.msra.mxu0 %v1559
      %1563 = vmatprep.subr.bf16.mxu0 0
      %1564 = vmatpush1.bf16.msra.mxu0 0
      %1565 = vmatprep.subr.bf16.mxu0 0
      %1566 = vmatpush1.bf16.msra.mxu0 0
      %1567 = vmatprep.subr.bf16.mxu0 0
      %1568 = vmatpush1.bf16.msra.mxu0 0
      %1569 = vmatprep.subr.bf16.mxu0 0
      %1570 = vmatpush1.bf16.msra.mxu0 0
      %1571 = vmatprep.subr.bf16.mxu0 0
      %1572 = vmatpush1.bf16.msra.mxu0 0
      %1573 = vmatprep.subr.bf16.mxu0 0
      %1574 = vmatpush1.bf16.msra.mxu0 0
      %1575 = vmatprep.subr.bf16.mxu0 0
      %1576 = vmatpush1.bf16.msra.mxu0 0
      %1577 = vmatprep.subr.bf16.mxu0 0
      %1578 = vmatpush1.bf16.msra.mxu0 0
      %1579 = vmatprep.subr.bf16.mxu0 0
      %1580 = vmatpush1.bf16.msra.mxu0 0
      %1581 = vmatprep.subr.bf16.mxu0 0
      %1582 = vmatpush1.bf16.msra.mxu0 0
      %1583 = vmatprep.subr.bf16.mxu0 0
      %1584 = vmatpush1.bf16.msra.mxu0 0
      %1585 = vmatprep.subr.bf16.mxu0 0
      %1586 = vmatpush1.bf16.msra.mxu0 0
      %1587 = vmatprep.subr.bf16.mxu0 0
      %1588 = vmatpush1.bf16.msra.mxu0 0
      %1589 = vmatprep.subr.bf16.mxu0 0
      %1590 = vmatpush1.bf16.msra.mxu0 0
      %1591 = vmatprep.subr.bf16.mxu0 0
      %1592 = vmatpush1.bf16.msra.mxu0 0
      %1593 = vmatprep.mubr.bf16.mxu0 0
      %1594 = vmatmul.mubr.bf16.gmra.mrb[0].mxu0 %v479
      %v1595 = vpop.f32.mrb[0].mxu0
      %v1596 = vadd.f32 0.0, %v1595
      %v1597 = vpop.f32.mrb[0].mxu0
      %v1598 = vpop.f32.mrb[0].mxu0
      %v1599 = vadd.f32 0.0, %v1598
      %v1600 = vpop.f32.mrb[0].mxu0
      %1601 = vmatprep.mubr.bf16.mxu0 0
      %1602 = vmatmul.mubr.bf16.gmra.mrb[0].mxu0 %v482
      %v1603 = vpop.f32.mrb[0].mxu0
      %v1604 = vadd.f32 0.0, %v1603
      %v1605 = vpop.f32.mrb[0].mxu0
      %v1606 = vpop.f32.mrb[0].mxu0
      %v1607 = vadd.f32 0.0, %v1606
      %v1608 = vpop.f32.mrb[0].mxu0
      %1609 = vmatprep.mubr.bf16.mxu0 0
      %1610 = vmatmul.mubr.bf16.gmra.mrb[0].mxu0 %v485
      %v1611 = vpop.f32.mrb[0].mxu0
      %v1612 = vadd.f32 0.0, %v1611
      %v1613 = vpop.f32.mrb[0].mxu0
      %v1614 = vpop.f32.mrb[0].mxu0
      %v1615 = vadd.f32 0.0, %v1614
      %v1616 = vpop.f32.mrb[0].mxu0
      %1617 = vmatprep.mubr.bf16.mxu0 0
      %1618 = vmatmul.mubr.bf16.gmra.mrb[0].mxu0 %v488
      %v1619 = vpop.f32.mrb[0].mxu0
      %v1620 = vadd.f32 0.0, %v1619
      %v1621 = vpop.f32.mrb[0].mxu0
      %v1622 = vpop.f32.mrb[0].mxu0
      %v1623 = vadd.f32 0.0, %v1622
      %v1624 = vpop.f32.mrb[0].mxu0
      %1625 = vmatprep.mubr.bf16.mxu0 0
      %1626 = vmatmul.mubr.bf16.gmra.mrb[0].mxu0 %v491
      %v1627 = vpop.f32.mrb[0].mxu0
      %v1628 = vadd.f32 0.0, %v1627
      %v1629 = vpop.f32.mrb[0].mxu0
      %v1630 = vpop.f32.mrb[0].mxu0
      %v1631 = vadd.f32 0.0, %v1630
      %v1632 = vpop.f32.mrb[0].mxu0
      %1633 = vmatprep.mubr.bf16.mxu0 0
      %1634 = vmatmul.mubr.bf16.gmra.mrb[0].mxu0 %v494
      %v1635 = vpop.f32.mrb[0].mxu0
      %v1636 = vadd.f32 0.0, %v1635
      %v1637 = vpop.f32.mrb[0].mxu0
      %v1638 = vpop.f32.mrb[0].mxu0
      %v1639 = vadd.f32 0.0, %v1638
      %v1640 = vpop.f32.mrb[0].mxu0
      %1641 = vmatprep.mubr.bf16.mxu0 0
      %1642 = vmatmul.mubr.bf16.gmra.mrb[0].mxu0 %v1150
      %v1643 = vpop.f32.mrb[0].mxu0
      %v1644 = vadd.f32 0.0, %v1643
      %v1645 = vpop.f32.mrb[0].mxu0
      %v1646 = vpop.f32.mrb[0].mxu0
      %v1647 = vadd.f32 0.0, %v1646
      %v1648 = vpop.f32.mrb[0].mxu0
      %1649 = vmatprep.mubr.bf16.mxu0 0
      %1650 = vmatmul.mubr.bf16.gmra.mrb[0].mxu0 %v1556
      %v1651 = vpop.f32.mrb[0].mxu0
      %v1652 = vadd.f32 0.0, %v1651
      %v1653 = vpop.f32.mrb[0].mxu0
      %v1654 = vpop.f32.mrb[0].mxu0
      %v1655 = vadd.f32 0.0, %v1654
      %v1656 = vpop.f32.mrb[0].mxu0
      %1657 = vdwg.mxu0
      %v1658 = vadd.f32 %v1510, %v1596
      %v1659 = vadd.f32 %v1511, %v1599
      %v1660 = vadd.f32 %v1512, %v1604
      %v1661 = vadd.f32 %v1513, %v1607
      %v1662 = vadd.f32 %v1514, %v1612
      %v1663 = vadd.f32 %v1515, %v1615
      %v1664 = vadd.f32 %v1516, %v1620
      %v1665 = vadd.f32 %v1517, %v1623
      %v1666 = vadd.f32 %v1518, %v1628
      %v1667 = vadd.f32 %v1519, %v1631
      %v1668 = vadd.f32 %v1520, %v1636
      %v1669 = vadd.f32 %v1521, %v1639
      %v1670 = vadd.f32 %v1522, %v1644
      %v1671 = vadd.f32 %v1523, %v1647
      %v1672 = vadd.f32 %v1524, %v1652
      %v1673 = vadd.f32 %v1525, %v1655
      %v1675 = vrot.slane %v246, 5
      %v1676 = vrot.slane %v1675, 4
      %v1677 = vrot.slane %v247, 5
      %v1678 = vsel %vm771, %v1676, %v1677
      %v1679 = vrot.slane %v1677, 4
      %v1680 = vrot.slane %v248, 5
      %v1681 = vsel %vm771, %v1679, %v1680
      %s1682 = scalar_lea.vmem %s1, 16
      %v1683 = vld [vmem:[%s1682] sm:$0x3]
      %v1684 = vunpack.c.l.b16 %v1678
      %v1685 = vunpack.c.l.b16 %v1681
      %v1686 = vpack.c.b16 %v1685, %v1684
      %v1688 = vsel %vm471, %v1686, 0
      %v1691 = vsel %vm496, %v1683, 0
      %1693 = vmatprep.subr.bf16.mxu0 0
      %1694 = vmatpush1.bf16.msra.mxu0 %v1691
      %1695 = vmatprep.subr.bf16.mxu0 0
      %1696 = vmatpush1.bf16.msra.mxu0 0
      %1697 = vmatprep.subr.bf16.mxu0 0
      %1698 = vmatpush1.bf16.msra.mxu0 0
      %1699 = vmatprep.subr.bf16.mxu0 0
      %1700 = vmatpush1.bf16.msra.mxu0 0
      %1701 = vmatprep.subr.bf16.mxu0 0
      %1702 = vmatpush1.bf16.msra.mxu0 0
      %1703 = vmatprep.subr.bf16.mxu0 0
      %1704 = vmatpush1.bf16.msra.mxu0 0
      %1705 = vmatprep.subr.bf16.mxu0 0
      %1706 = vmatpush1.bf16.msra.mxu0 0
      %1707 = vmatprep.subr.bf16.mxu0 0
      %1708 = vmatpush1.bf16.msra.mxu0 0
      %1709 = vmatprep.subr.bf16.mxu0 0
      %1710 = vmatpush1.bf16.msra.mxu0 0
      %1711 = vmatprep.subr.bf16.mxu0 0
      %1712 = vmatpush1.bf16.msra.mxu0 0
      %1713 = vmatprep.subr.bf16.mxu0 0
      %1714 = vmatpush1.bf16.msra.mxu0 0
      %1715 = vmatprep.subr.bf16.mxu0 0
      %1716 = vmatpush1.bf16.msra.mxu0 0
      %1717 = vmatprep.subr.bf16.mxu0 0
      %1718 = vmatpush1.bf16.msra.mxu0 0
      %1719 = vmatprep.subr.bf16.mxu0 0
      %1720 = vmatpush1.bf16.msra.mxu0 0
      %1721 = vmatprep.subr.bf16.mxu0 0
      %1722 = vmatpush1.bf16.msra.mxu0 0
      %1723 = vmatprep.subr.bf16.mxu0 0
      %1724 = vmatpush1.bf16.msra.mxu0 0
      %1725 = vmatprep.mubr.bf16.mxu0 0
      %1726 = vmatmul.mubr.bf16.gmra.mrb[0].mxu0 %v861
      %v1727 = vpop.f32.mrb[0].mxu0
      %v1728 = vadd.f32 0.0, %v1727
      %v1729 = vpop.f32.mrb[0].mxu0
      %v1730 = vpop.f32.mrb[0].mxu0
      %v1731 = vadd.f32 0.0, %v1730
      %v1732 = vpop.f32.mrb[0].mxu0
      %1733 = vmatprep.mubr.bf16.mxu0 0
      %1734 = vmatmul.mubr.bf16.gmra.mrb[0].mxu0 %v864
      %v1735 = vpop.f32.mrb[0].mxu0
      %v1736 = vadd.f32 0.0, %v1735
      %v1737 = vpop.f32.mrb[0].mxu0
      %v1738 = vpop.f32.mrb[0].mxu0
      %v1739 = vadd.f32 0.0, %v1738
      %v1740 = vpop.f32.mrb[0].mxu0
      %1741 = vmatprep.mubr.bf16.mxu0 0
      %1742 = vmatmul.mubr.bf16.gmra.mrb[0].mxu0 %v867
      %v1743 = vpop.f32.mrb[0].mxu0
      %v1744 = vadd.f32 0.0, %v1743
      %v1745 = vpop.f32.mrb[0].mxu0
      %v1746 = vpop.f32.mrb[0].mxu0
      %v1747 = vadd.f32 0.0, %v1746
      %v1748 = vpop.f32.mrb[0].mxu0
      %1749 = vmatprep.mubr.bf16.mxu0 0
      %1750 = vmatmul.mubr.bf16.gmra.mrb[0].mxu0 %v870
      %v1751 = vpop.f32.mrb[0].mxu0
      %v1752 = vadd.f32 0.0, %v1751
      %v1753 = vpop.f32.mrb[0].mxu0
      %v1754 = vpop.f32.mrb[0].mxu0
      %v1755 = vadd.f32 0.0, %v1754
      %v1756 = vpop.f32.mrb[0].mxu0
      %1757 = vmatprep.mubr.bf16.mxu0 0
      %1758 = vmatmul.mubr.bf16.gmra.mrb[0].mxu0 %v873
      %v1759 = vpop.f32.mrb[0].mxu0
      %v1760 = vadd.f32 0.0, %v1759
      %v1761 = vpop.f32.mrb[0].mxu0
      %v1762 = vpop.f32.mrb[0].mxu0
      %v1763 = vadd.f32 0.0, %v1762
      %v1764 = vpop.f32.mrb[0].mxu0
      %1765 = vmatprep.mubr.bf16.mxu0 0
      %1766 = vmatmul.mubr.bf16.gmra.mrb[0].mxu0 %v876
      %v1767 = vpop.f32.mrb[0].mxu0
      %v1768 = vadd.f32 0.0, %v1767
      %v1769 = vpop.f32.mrb[0].mxu0
      %v1770 = vpop.f32.mrb[0].mxu0
      %v1771 = vadd.f32 0.0, %v1770
      %v1772 = vpop.f32.mrb[0].mxu0
      %1773 = vmatprep.mubr.bf16.mxu0 0
      %1774 = vmatmul.mubr.bf16.gmra.mrb[0].mxu0 %v1282
      %v1775 = vpop.f32.mrb[0].mxu0
      %v1776 = vadd.f32 0.0, %v1775
      %v1777 = vpop.f32.mrb[0].mxu0
      %v1778 = vpop.f32.mrb[0].mxu0
      %v1779 = vadd.f32 0.0, %v1778
      %v1780 = vpop.f32.mrb[0].mxu0
      %1781 = vmatprep.mubr.bf16.mxu0 0
      %1782 = vmatmul.mubr.bf16.gmra.mrb[0].mxu0 %v1688
      %v1783 = vpop.f32.mrb[0].mxu0
      %v1784 = vadd.f32 0.0, %v1783
      %v1785 = vpop.f32.mrb[0].mxu0
      %v1786 = vpop.f32.mrb[0].mxu0
      %v1787 = vadd.f32 0.0, %v1786
      %v1788 = vpop.f32.mrb[0].mxu0
      %1789 = vdwg.mxu0
      %v1790 = vadd.f32 %v1658, %v1728
      %v1791 = vadd.f32 %v1659, %v1731
      %v1792 = vadd.f32 %v1660, %v1736
      %v1793 = vadd.f32 %v1661, %v1739
      %v1794 = vadd.f32 %v1662, %v1744
      %v1795 = vadd.f32 %v1663, %v1747
      %v1796 = vadd.f32 %v1664, %v1752
      %v1797 = vadd.f32 %v1665, %v1755
      %v1798 = vadd.f32 %v1666, %v1760
      %v1799 = vadd.f32 %v1667, %v1763
      %v1800 = vadd.f32 %v1668, %v1768
      %v1801 = vadd.f32 %v1669, %v1771
      %v1802 = vadd.f32 %v1670, %v1776
      %v1803 = vadd.f32 %v1671, %v1779
      %v1804 = vadd.f32 %v1672, %v1784
      %v1805 = vadd.f32 %v1673, %v1787
      %v1806 = vadd.f32 %v1790, %v1791
      %v1807 = vadd.f32 %v1806, %v1792
      %v1808 = vadd.f32 %v1807, %v1793
      %v1809 = vadd.f32 %v1808, %v1794
      %v1810 = vadd.f32 %v1809, %v1795
      %v1811 = vadd.f32 %v1810, %v1796
      %v1812 = vadd.f32 %v1811, %v1797
      %v1813 = vadd.f32 %v1812, %v1798
      %v1814 = vadd.f32 %v1813, %v1799
      %v1815 = vadd.f32 %v1814, %v1800
      %v1816 = vadd.f32 %v1815, %v1801
      %v1817 = vadd.f32 %v1816, %v1802
      %v1818 = vadd.f32 %v1817, %v1803
      %v1819 = vadd.f32 %v1818, %v1804
      %v1820 = vadd.f32 %v1819, %v1805
      %v1821 = vrot.slane %v1820, 4
      %v1822 = vadd.f32 %v1820, %v1821
      %v1823 = vrot.slane %v1822, 2
      %v1824 = vadd.f32 %v1822, %v1823
      %v1825 = vrot.slane %v1824, 1
      %v1826 = vadd.f32 %v1824, %v1825
      %1827 = vst [vmem:[%s211] sm:$0x1] %v1826
      %v1828 = vmul.f32 %v1790, %v1790
      %v1829 = vmul.f32 %v1791, %v1791
      %v1830 = vmul.f32 %v1792, %v1792
      %v1831 = vmul.f32 %v1793, %v1793
      %v1832 = vmul.f32 %v1794, %v1794
      %v1833 = vmul.f32 %v1795, %v1795
      %v1834 = vmul.f32 %v1796, %v1796
      %v1835 = vmul.f32 %v1797, %v1797
      %v1836 = vmul.f32 %v1798, %v1798
      %v1837 = vmul.f32 %v1799, %v1799
      %v1838 = vmul.f32 %v1800, %v1800
      %v1839 = vmul.f32 %v1801, %v1801
      %v1840 = vmul.f32 %v1802, %v1802
      %v1841 = vmul.f32 %v1803, %v1803
      %v1842 = vmul.f32 %v1804, %v1804
      %v1843 = vmul.f32 %v1805, %v1805
      %v1844 = vadd.f32 %v1828, %v1829
      %v1845 = vadd.f32 %v1844, %v1830
      %v1846 = vadd.f32 %v1845, %v1831
      %v1847 = vadd.f32 %v1846, %v1832
      %v1848 = vadd.f32 %v1847, %v1833
      %v1849 = vadd.f32 %v1848, %v1834
      %v1850 = vadd.f32 %v1849, %v1835
      %v1851 = vadd.f32 %v1850, %v1836
      %v1852 = vadd.f32 %v1851, %v1837
      %v1853 = vadd.f32 %v1852, %v1838
      %v1854 = vadd.f32 %v1853, %v1839
      %v1855 = vadd.f32 %v1854, %v1840
      %v1856 = vadd.f32 %v1855, %v1841
      %v1857 = vadd.f32 %v1856, %v1842
      %v1858 = vadd.f32 %v1857, %v1843
      %v1859 = vrot.slane %v1858, 4
      %v1860 = vadd.f32 %v1858, %v1859
      %v1861 = vrot.slane %v1860, 2
      %v1862 = vadd.f32 %v1860, %v1861
      %v1863 = vrot.slane %v1862, 1
      %v1864 = vadd.f32 %v1862, %v1863
      %1865 = vst [vmem:[%s211 + $0x1] sm:$0x1] %v1864
      %v1866 = vpack.c.bf16 %v1791, %v1790
      %v1867 = vpack.c.bf16 %v1793, %v1792
      %v1868 = vpack.c.bf16 %v1795, %v1794
      %v1869 = vpack.c.bf16 %v1797, %v1796
      %v1870 = vpack.c.bf16 %v1799, %v1798
      %v1871 = vpack.c.bf16 %v1801, %v1800
      %v1872 = vpack.c.bf16 %v1803, %v1802
      %v1873 = vpack.c.bf16 %v1805, %v1804
      %v1882 = vunpack.c.l.b16 %v1866
      %v1883 = vunpack.c.h.b16 %v1866
      %v1884 = vunpack.c.l.b16 %v1867
      %v1885 = vunpack.c.h.b16 %v1867
      %v1886 = vunpack.c.l.b16 %v1868
      %v1887 = vunpack.c.h.b16 %v1868
      %v1888 = vunpack.c.l.b16 %v1869
      %v1889 = vunpack.c.h.b16 %v1869
      %v1890 = vunpack.c.l.b16 %v1870
      %v1891 = vunpack.c.h.b16 %v1870
      %v1892 = vunpack.c.l.b16 %v1871
      %v1893 = vunpack.c.h.b16 %v1871
      %v1894 = vunpack.c.l.b16 %v1872
      %v1895 = vunpack.c.h.b16 %v1872
      %v1896 = vunpack.c.l.b16 %v1873
      %v1897 = vunpack.c.h.b16 %v1873
      %v1898 = vpack.c.b16 %v1882, %v1882
      %v1899 = vpack.c.b16 %v1883, %v1883
      %v1900 = vpack.c.b16 %v1884, %v1884
      %v1901 = vpack.c.b16 %v1885, %v1885
      %v1902 = vpack.c.b16 %v1886, %v1886
      %v1903 = vpack.c.b16 %v1887, %v1887
      %v1904 = vpack.c.b16 %v1888, %v1888
      %v1905 = vpack.c.b16 %v1889, %v1889
      %v1906 = vpack.c.b16 %v1890, %v1890
      %v1907 = vpack.c.b16 %v1891, %v1891
      %v1908 = vpack.c.b16 %v1892, %v1892
      %v1909 = vpack.c.b16 %v1893, %v1893
      %v1910 = vpack.c.b16 %v1894, %v1894
      %v1911 = vpack.c.b16 %v1895, %v1895
      %v1912 = vpack.c.b16 %v1896, %v1896
      %v1913 = vpack.c.b16 %v1897, %v1897
      %1930 = vst [vmem:[%s203] sm:$0xf] %v1898
      %1931 = vst [vmem:[%s203 + $0x4] sm:$0xf] %v1899
      %1932 = vst [vmem:[%s203 + $0x8] sm:$0xf] %v1900
      %1933 = vst [vmem:[%s203 + $0xc] sm:$0xf] %v1901
      %1934 = vst [vmem:[%s203 + $0x10] sm:$0xf] %v1902
      %1935 = vst [vmem:[%s203 + $0x14] sm:$0xf] %v1903
      %1936 = vst [vmem:[%s203 + $0x18] sm:$0xf] %v1904
      %1937 = vst [vmem:[%s203 + $0x1c] sm:$0xf] %v1905
      %1938 = vst [vmem:[%s203 + $0x20] sm:$0xf] %v1906
      %1939 = vst [vmem:[%s203 + $0x24] sm:$0xf] %v1907
      %1940 = vst [vmem:[%s203 + $0x28] sm:$0xf] %v1908
      %1941 = vst [vmem:[%s203 + $0x2c] sm:$0xf] %v1909
      %1942 = vst [vmem:[%s203 + $0x30] sm:$0xf] %v1910
      %1943 = vst [vmem:[%s203 + $0x34] sm:$0xf] %v1911
      %1944 = vst [vmem:[%s203 + $0x38] sm:$0xf] %v1912
      %1945 = vst [vmem:[%s203 + $0x3c] sm:$0xf] %v1913
      %s1946 = smul.u32 %s19, 2
      %s1947 = sadd.s32 %s1946, %s20
      %p1948 = scmp.lt.s32.totalorder %s1947, 3
      %s1949 = scalar_select %p1948, %s1947, 3
      %s1950 = smul.addr %s1949, 16
      %s1951 = smul.addr %s1950, 4
      %s1952 = scalar_lea.vmem %s2, %s1951
      %s1953 = smul.u32 %s19, 2
      %s1954 = sadd.s32 %s1953, %s20
      %p1955 = scmp.lt.s32.totalorder %s1954, 3
      %s1956 = scalar_select %p1955, %s1954, 3
      %s1957 = smul.addr %s1956, 2
      %s1958 = scalar_lea.vmem %s3, %s1957
      // Predicated region
      $region29: #{cnn_block.2} parent=27 // pred_check
        %p1959 = pneg %p96
      $region30: #{cnn_block.2} parent=27 // pred_check_branch
        %1961 = sbr.rel (%p1959) target = $region32
      $region31: #{cnn_block.2} parent=27 // pred_region
        %s1962 = smul.u32 %s19, 2
        %s1963 = sadd.s32 %s1962, %s20
      $region32: #{cnn_block.2} parent=27 // pred_fallthru
        _
      // Predicated region
      $region33: #{cnn_block.2} parent=27 // pred_check
        %p1964 = pneg %p126
      $region34: #{cnn_block.2} parent=27 // pred_check_branch
        %1966 = sbr.rel (%p1964) target = $region36
      $region35: #{cnn_block.2} parent=27 // pred_region
        %s1967 = smul.u32 %s19, 2
        %s1968 = sadd.s32 %s1967, %s20
      $region36: #{cnn_block.2} parent=27 // pred_fallthru
        _
    $region28: #{cnn_block.2} parent=5 // pred_fallthru
      _
    %p1969 = scmp.le.s32.totalorder 2, %s10
    // Predicated region
    $region37: #{cnn_block.2} parent=5 // pred_check
      %p1970 = pneg %p1969
    $region38: #{cnn_block.2} parent=5 // pred_check_branch
      %1972 = sbr.rel (%p1970) target = $region40
    $region39: #{cnn_block.2} parent=5 // pred_region
      %s1973 = ssub.s32 %s10, 2
      // Predicated region
      $region41: #{cnn_block.2} parent=39 // pred_check
        %p1974 = pneg %p102
      $region42: #{cnn_block.2} parent=39 // pred_check_branch
        %1976 = sbr.rel (%p1974) target = $region44
      $region43: #{cnn_block.2} parent=39 // pred_region
        %s1977 = smul.u32 %s21, 2
        %s1978 = sadd.s32 %s1977, %s22
        %p1979 = scmp.lt.s32.totalorder %s1978, 3
        %s1980 = scalar_select %p1979, %s1978, 3
        %s1981 = smul.addr %s1980, 16
        %s1982 = smul.addr %s1981, 4
        %s1983 = scalar_lea.vmem %s2, %s1982
      $region44: #{cnn_block.2} parent=39 // pred_fallthru
        _
      // Predicated region
      $region45: #{cnn_block.2} parent=39 // pred_check
        %p1984 = pneg %p132
      $region46: #{cnn_block.2} parent=39 // pred_check_branch
        %1986 = sbr.rel (%p1984) target = $region48
      $region47: #{cnn_block.2} parent=39 // pred_region
        %s1987 = smul.u32 %s21, 2
        %s1988 = sadd.s32 %s1987, %s22
        %p1989 = scmp.lt.s32.totalorder %s1988, 3
        %s1990 = scalar_select %p1989, %s1988, 3
        %s1991 = smul.addr %s1990, 2
        %s1992 = scalar_lea.vmem %s3, %s1991
      $region48: #{cnn_block.2} parent=39 // pred_fallthru
        _
    $region40: #{cnn_block.2} parent=5 // pred_fallthru
      _
  $region6: #{cnn_block.2} parent=0 // loop_footer
    %s14 = sadd.s32 1, %s10
  $region7: #{cnn_block.2} parent=0 // loop_footer_branch
    %9 = sbr.rel target = $region3
  $region8: #{cnn_block.2} parent=0 // loop_exit
    _

</llo_original>
